<compile_context>
chip_gen: v5e
topology: v5e:2x2
jax: 0.10.0
libtpu: 0.0.40
codegen_flags: <defaults>
</compile_context>

<pallas_src>
import jax
import jax.numpy as jnp
from jax.experimental import pallas as pl
from jax.experimental.pallas import tpu as pltpu

POOL_SIZES = (5, 9, 13)   # MaxPool2d kernel sizes, stride=1, padding=k//2
OUTPUT_SIZE = (13, 13)    # unused by forward(); kept for parity with the module
_MAX_PAD = max(POOL_SIZES) // 2      # 6
_N_BRANCH = 1 + len(POOL_SIZES)      # identity + 3 pooled maps


def _fill_value(dtype):
    """Padding value matching PyTorch MaxPool2d's implicit -inf padding."""
    if jnp.issubdtype(dtype, jnp.floating):
        return -jnp.inf
    return jnp.iinfo(dtype).min


def _shift_up(a, s, axis, pad):
    """b[i] = a[i + s] along `axis` (s > 0); positions shifted in past the end
    are taken from `pad` (a hoisted -inf block), i.e. behave like -inf padding."""
    n = a.shape[axis]
    if s == 0:
        return a
    if s >= n:                       # degenerate tiny-dim case: all out of range
        return jnp.full(a.shape, _fill_value(a.dtype), a.dtype)
    body = jax.lax.slice_in_dim(a, s, n, axis=axis)
    tail = jax.lax.slice_in_dim(pad, 0, s, axis=axis)
    return jnp.concatenate([body, tail], axis=axis)


def _row_pool_5_9_13(x, pad_h):
    """Shared separable row pass along axis 0 (H).

    Returns the centered sliding-window maxima for windows 5, 9 and 13 (stride
    1, -inf padding), computed from ONE left-aligned log-doubling chain."""
    ax = 0
    h = x.shape[0]
    # Left-pad by 6 rows of -inf so windows that start above row 0 are covered;
    # the right edge is handled by -inf shift-ins.
    a1 = jnp.concatenate(
        [jax.lax.slice_in_dim(pad_h, 0, _MAX_PAD, axis=ax), x], axis=ax)
    a2 = jnp.maximum(a1, _shift_up(a1, 1, ax, pad_h))    # width 2
    a4 = jnp.maximum(a2, _shift_up(a2, 2, ax, pad_h))    # width 4
    a8 = jnp.maximum(a4, _shift_up(a4, 4, ax, pad_h))    # width 8
    a5 = jnp.maximum(a4, _shift_up(a1, 4, ax, pad_h))    # width 5
    a9 = jnp.maximum(a8, _shift_up(a1, 8, ax, pad_h))    # width 9
    a13 = jnp.maximum(a8, _shift_up(a5, 8, ax, pad_h))   # width 13
    # a_k index j maps to source row (j - 6); centered window-k output row r is
    # a_k[r + 6 - k//2].
    return (jax.lax.slice_in_dim(a5, _MAX_PAD - 2, _MAX_PAD - 2 + h, axis=ax),
            jax.lax.slice_in_dim(a9, _MAX_PAD - 4, _MAX_PAD - 4 + h, axis=ax),
            jax.lax.slice_in_dim(a13, 0, h, axis=ax))


def _col_pool_k(r, k, pad_w):
    """Centered sliding-window max of width k (5/9/13) along axis 1 (W)."""
    ax = 1
    p = k // 2
    w = r.shape[1]
    a1 = jnp.concatenate(
        [jax.lax.slice_in_dim(pad_w, 0, p, axis=ax), r], axis=ax)
    a2 = jnp.maximum(a1, _shift_up(a1, 1, ax, pad_w))
    a4 = jnp.maximum(a2, _shift_up(a2, 2, ax, pad_w))
    if k == 5:
        ak = jnp.maximum(a4, _shift_up(a1, 4, ax, pad_w))
    elif k == 9:
        a8 = jnp.maximum(a4, _shift_up(a4, 4, ax, pad_w))
        ak = jnp.maximum(a8, _shift_up(a1, 8, ax, pad_w))
    elif k == 13:
        a8 = jnp.maximum(a4, _shift_up(a4, 4, ax, pad_w))
        a5 = jnp.maximum(a4, _shift_up(a1, 4, ax, pad_w))
        ak = jnp.maximum(a8, _shift_up(a5, 8, ax, pad_w))
    else:
        raise NotImplementedError(f"pool size {k}")
    # a_k index j maps to source column (j - p); centered output col c is a_k[c].
    return jax.lax.slice_in_dim(ak, 0, w, axis=ax)


def spp_kernel(x_ref, o_ref):
    # x_ref: (1, H, W, Cb)      channel-last input block
    # o_ref: (1, 4, H, W, Cb)   [identity, pool5, pool9, pool13] along axis 1
    x = x_ref[0]                              # (H, W, Cb)
    h, w, cb = x.shape
    fill = _fill_value(x.dtype)

    # Hoisted -inf blocks used for left padding and shift-in fill (broadcasts
    # are not CSE'd by JAX, so build them exactly once).
    pad_h = jnp.full((8, w, cb), fill, dtype=x.dtype)
    pad_w = jnp.full((h, 8, cb), fill, dtype=x.dtype)

    # Identity branch of the concat.
    o_ref[0, 0] = x

    # Separable pooling: shared row pass, then per-k column pass.
    r5, r9, r13 = _row_pool_5_9_13(x, pad_h)
    o_ref[0, 1] = _col_pool_k(r5, 5, pad_w)
    o_ref[0, 2] = _col_pool_k(r9, 9, pad_w)
    o_ref[0, 3] = _col_pool_k(r13, 13, pad_w)


def _pick_channel_block(c):
    # Last block dim must be a multiple of 128 or equal the full channel count.
    if c % 256 == 0:
        return 256
    if c % 128 == 0:
        return 128
    return c


def spatial_pyramid_pooling(x, *, channel_block=None):
    """x: (N, C, H, W) -> (N, C * (1 + len(POOL_SIZES)), H, W)  (NCHW, like PyTorch)."""
    n, c, h, w = x.shape
    cb = _pick_channel_block(c) if channel_block is None else channel_block
    assert c % cb == 0, (c, cb)

    # Lane-dense layout for the kernel: channels on the 128-lane axis.
    x_nhwc = jnp.transpose(x, (0, 2, 3, 1))          # (N, H, W, C)

    # Only set an explicit VMEM budget when large blocks would exceed the
    # default scoped limit; cap conservatively for v7x (64 MiB physical).
    elem = jnp.dtype(x.dtype).itemsize
    block_bytes = 2 * (1 + _N_BRANCH) * h * w * cb * elem   # double-buffered in+out
    vmem_limit = None
    if block_bytes > (30 << 20):
        vmem_limit = min(block_bytes + (8 << 20), 48 << 20)

    out = pl.pallas_call(
        spp_kernel,
        out_shape=jax.ShapeDtypeStruct((n, _N_BRANCH, h, w, c), x.dtype),
        grid_spec=pltpu.PrefetchScalarGridSpec(
            num_scalar_prefetch=0,
            grid=(n, c // cb),
            in_specs=[pl.BlockSpec((1, h, w, cb), lambda b, cblk: (b, 0, 0, cblk))],
            out_specs=pl.BlockSpec((1, _N_BRANCH, h, w, cb),
                                   lambda b, cblk: (b, 0, 0, 0, cblk)),
        ),
        compiler_params=pltpu.CompilerParams(
            dimension_semantics=("parallel", "parallel"),
            vmem_limit_bytes=vmem_limit,
        ),
    )(x_nhwc)

    # (N, 4, H, W, C) -> (N, 4, C, H, W) -> (N, 4C, H, W): matches
    # torch.cat([x, pool5, pool9, pool13], dim=1).
    out = jnp.transpose(out, (0, 1, 4, 2, 3)).reshape(n, _N_BRANCH * c, h, w)
    return out


def _reference_spp(x):
    """Plain-JAX reference matching PyTorch MaxPool2d(k, stride=1, pad=k//2)."""
    outs = [x]
    for k in POOL_SIZES:
        p = k // 2
        pooled = jax.lax.reduce_window(
            x, -jnp.inf, jax.lax.max,
            window_dimensions=(1, 1, k, k),
            window_strides=(1, 1, 1, 1),
            padding=((0, 0), (0, 0), (p, p), (p, p)),
        )
        outs.append(pooled.astype(x.dtype))
    return jnp.concatenate(outs, axis=1)


if __name__ == "__main__":
    key = jax.random.PRNGKey(0)
    N, C, H, W = 2, 4, 16, 16
    x = jax.random.normal(key, (N, C, H, W), dtype=jnp.float32)

    out = jax.block_until_ready(spatial_pyramid_pooling(x))

    ref = _reference_spp(x)
    assert out.shape == (N, C * _N_BRANCH, H, W), out.shape
    assert jnp.allclose(out, ref, atol=0.0, rtol=0.0), "mismatch vs reference"

    print("KERNEL_OK")
</pallas_src>

<mosaic_0001>
module attributes {stable_mosaic.version = 11 : i64} {
  func.func @spp_kernel(%arg0: i32, %arg1: i32, %arg2: memref<1x16x16x4xf32, #tpu.memory_space<vmem>>, %arg3: memref<1x4x16x16x4xf32, #tpu.memory_space<vmem>>) attributes {dimension_semantics = [#tpu.dimension_semantics<parallel>, #tpu.dimension_semantics<parallel>], iteration_bounds = array<i64: 2, 1>, scalar_prefetch = 0 : i64, scratch_operands = 0 : i64, tpu.core_type = #tpu.core_type<tc>, window_params = [{transform_indices = @transform_0, window_bounds = array<i64: 1, 16, 16, 4>}, {transform_indices = @transform_1, window_bounds = array<i64: 1, 4, 16, 16, 4>}]} {
    %c0 = arith.constant 0 : index
    %c0_0 = arith.constant 0 : index
    %c0_1 = arith.constant 0 : index
    %c0_2 = arith.constant 0 : index
    %0 = vector.load %arg2[%c0, %c0_0, %c0_1, %c0_2] : memref<1x16x16x4xf32, #tpu.memory_space<vmem>>, vector<1x16x16x4xf32>
    %1 = vector.shape_cast %0 : vector<1x16x16x4xf32> to vector<16x16x4xf32>
    %cst = arith.constant 0xFF800000 : f32
    %2 = vector.broadcast %cst : f32 to vector<8x16x4xf32>
    %cst_3 = arith.constant 0xFF800000 : f32
    %3 = vector.broadcast %cst_3 : f32 to vector<16x8x4xf32>
    %c0_4 = arith.constant 0 : index
    %c0_5 = arith.constant 0 : index
    %c0_6 = arith.constant 0 : index
    %c0_7 = arith.constant 0 : index
    %c0_8 = arith.constant 0 : index
    %4 = vector.load %arg3[%c0_4, %c0_5, %c0_6, %c0_7, %c0_8] : memref<1x4x16x16x4xf32, #tpu.memory_space<vmem>>, vector<1x1x16x16x4xf32>
    %5 = vector.shape_cast %4 : vector<1x1x16x16x4xf32> to vector<16x16x4xf32>
    %6 = vector.shape_cast %1 : vector<16x16x4xf32> to vector<1x1x16x16x4xf32>
    tpu.vector_store %arg3[%c0_4, %c0_5, %c0_6, %c0_7, %c0_8], %6 {strides = array<i32>} : memref<1x4x16x16x4xf32, #tpu.memory_space<vmem>>, vector<1x1x16x16x4xf32>,
    %7 = vector.extract_strided_slice %2 {offsets = [0, 0, 0], sizes = [6, 16, 4], strides = [1, 1, 1]} : vector<8x16x4xf32> to vector<6x16x4xf32>
    %8 = tpu.concatenate %7, %1 in 0 : vector<6x16x4xf32>, vector<16x16x4xf32> -> vector<22x16x4xf32>
    %9 = vector.extract_strided_slice %8 {offsets = [1, 0, 0], sizes = [21, 16, 4], strides = [1, 1, 1]} : vector<22x16x4xf32> to vector<21x16x4xf32>
    %10 = vector.extract_strided_slice %2 {offsets = [0, 0, 0], sizes = [1, 16, 4], strides = [1, 1, 1]} : vector<8x16x4xf32> to vector<1x16x4xf32>
    %11 = tpu.concatenate %9, %10 in 0 : vector<21x16x4xf32>, vector<1x16x4xf32> -> vector<22x16x4xf32>
    %12 = arith.maximumf %8, %11 : vector<22x16x4xf32>
    %13 = vector.extract_strided_slice %12 {offsets = [2, 0, 0], sizes = [20, 16, 4], strides = [1, 1, 1]} : vector<22x16x4xf32> to vector<20x16x4xf32>
    %14 = vector.extract_strided_slice %2 {offsets = [0, 0, 0], sizes = [2, 16, 4], strides = [1, 1, 1]} : vector<8x16x4xf32> to vector<2x16x4xf32>
    %15 = tpu.concatenate %13, %14 in 0 : vector<20x16x4xf32>, vector<2x16x4xf32> -> vector<22x16x4xf32>
    %16 = arith.maximumf %12, %15 : vector<22x16x4xf32>
    %17 = vector.extract_strided_slice %16 {offsets = [4, 0, 0], sizes = [18, 16, 4], strides = [1, 1, 1]} : vector<22x16x4xf32> to vector<18x16x4xf32>
    %18 = vector.extract_strided_slice %2 {offsets = [0, 0, 0], sizes = [4, 16, 4], strides = [1, 1, 1]} : vector<8x16x4xf32> to vector<4x16x4xf32>
    %19 = tpu.concatenate %17, %18 in 0 : vector<18x16x4xf32>, vector<4x16x4xf32> -> vector<22x16x4xf32>
    %20 = arith.maximumf %16, %19 : vector<22x16x4xf32>
    %21 = vector.extract_strided_slice %8 {offsets = [4, 0, 0], sizes = [18, 16, 4], strides = [1, 1, 1]} : vector<22x16x4xf32> to vector<18x16x4xf32>
    %22 = vector.extract_strided_slice %2 {offsets = [0, 0, 0], sizes = [4, 16, 4], strides = [1, 1, 1]} : vector<8x16x4xf32> to vector<4x16x4xf32>
    %23 = tpu.concatenate %21, %22 in 0 : vector<18x16x4xf32>, vector<4x16x4xf32> -> vector<22x16x4xf32>
    %24 = arith.maximumf %16, %23 : vector<22x16x4xf32>
    %25 = vector.extract_strided_slice %8 {offsets = [8, 0, 0], sizes = [14, 16, 4], strides = [1, 1, 1]} : vector<22x16x4xf32> to vector<14x16x4xf32>
    %26 = vector.extract_strided_slice %2 {offsets = [0, 0, 0], sizes = [8, 16, 4], strides = [1, 1, 1]} : vector<8x16x4xf32> to vector<8x16x4xf32>
    %27 = tpu.concatenate %25, %26 in 0 : vector<14x16x4xf32>, vector<8x16x4xf32> -> vector<22x16x4xf32>
    %28 = arith.maximumf %20, %27 : vector<22x16x4xf32>
    %29 = vector.extract_strided_slice %24 {offsets = [8, 0, 0], sizes = [14, 16, 4], strides = [1, 1, 1]} : vector<22x16x4xf32> to vector<14x16x4xf32>
    %30 = vector.extract_strided_slice %2 {offsets = [0, 0, 0], sizes = [8, 16, 4], strides = [1, 1, 1]} : vector<8x16x4xf32> to vector<8x16x4xf32>
    %31 = tpu.concatenate %29, %30 in 0 : vector<14x16x4xf32>, vector<8x16x4xf32> -> vector<22x16x4xf32>
    %32 = arith.maximumf %20, %31 : vector<22x16x4xf32>
    %33 = vector.extract_strided_slice %24 {offsets = [4, 0, 0], sizes = [16, 16, 4], strides = [1, 1, 1]} : vector<22x16x4xf32> to vector<16x16x4xf32>
    %34 = vector.extract_strided_slice %28 {offsets = [2, 0, 0], sizes = [16, 16, 4], strides = [1, 1, 1]} : vector<22x16x4xf32> to vector<16x16x4xf32>
    %35 = vector.extract_strided_slice %32 {offsets = [0, 0, 0], sizes = [16, 16, 4], strides = [1, 1, 1]} : vector<22x16x4xf32> to vector<16x16x4xf32>
    %36 = vector.extract_strided_slice %3 {offsets = [0, 0, 0], sizes = [16, 2, 4], strides = [1, 1, 1]} : vector<16x8x4xf32> to vector<16x2x4xf32>
    %37 = tpu.concatenate %36, %33 in 1 : vector<16x2x4xf32>, vector<16x16x4xf32> -> vector<16x18x4xf32>
    %38 = vector.extract_strided_slice %37 {offsets = [0, 1, 0], sizes = [16, 17, 4], strides = [1, 1, 1]} : vector<16x18x4xf32> to vector<16x17x4xf32>
    %39 = vector.extract_strided_slice %3 {offsets = [0, 0, 0], sizes = [16, 1, 4], strides = [1, 1, 1]} : vector<16x8x4xf32> to vector<16x1x4xf32>
    %40 = tpu.concatenate %38, %39 in 1 : vector<16x17x4xf32>, vector<16x1x4xf32> -> vector<16x18x4xf32>
    %41 = arith.maximumf %37, %40 : vector<16x18x4xf32>
    %42 = vector.extract_strided_slice %41 {offsets = [0, 2, 0], sizes = [16, 16, 4], strides = [1, 1, 1]} : vector<16x18x4xf32> to vector<16x16x4xf32>
    %43 = vector.extract_strided_slice %3 {offsets = [0, 0, 0], sizes = [16, 2, 4], strides = [1, 1, 1]} : vector<16x8x4xf32> to vector<16x2x4xf32>
    %44 = tpu.concatenate %42, %43 in 1 : vector<16x16x4xf32>, vector<16x2x4xf32> -> vector<16x18x4xf32>
    %45 = arith.maximumf %41, %44 : vector<16x18x4xf32>
    %46 = vector.extract_strided_slice %37 {offsets = [0, 4, 0], sizes = [16, 14, 4], strides = [1, 1, 1]} : vector<16x18x4xf32> to vector<16x14x4xf32>
    %47 = vector.extract_strided_slice %3 {offsets = [0, 0, 0], sizes = [16, 4, 4], strides = [1, 1, 1]} : vector<16x8x4xf32> to vector<16x4x4xf32>
    %48 = tpu.concatenate %46, %47 in 1 : vector<16x14x4xf32>, vector<16x4x4xf32> -> vector<16x18x4xf32>
    %49 = arith.maximumf %45, %48 : vector<16x18x4xf32>
    %50 = vector.extract_strided_slice %49 {offsets = [0, 0, 0], sizes = [16, 16, 4], strides = [1, 1, 1]} : vector<16x18x4xf32> to vector<16x16x4xf32>
    %c0_9 = arith.constant 0 : index
    %c1 = arith.constant 1 : index
    %c0_10 = arith.constant 0 : index
    %c0_11 = arith.constant 0 : index
    %c0_12 = arith.constant 0 : index
    %51 = vector.load %arg3[%c0_9, %c1, %c0_10, %c0_11, %c0_12] : memref<1x4x16x16x4xf32, #tpu.memory_space<vmem>>, vector<1x1x16x16x4xf32>
    %52 = vector.shape_cast %51 : vector<1x1x16x16x4xf32> to vector<16x16x4xf32>
    %53 = vector.shape_cast %50 : vector<16x16x4xf32> to vector<1x1x16x16x4xf32>
    tpu.vector_store %arg3[%c0_9, %c1, %c0_10, %c0_11, %c0_12], %53 {strides = array<i32>} : memref<1x4x16x16x4xf32, #tpu.memory_space<vmem>>, vector<1x1x16x16x4xf32>,
    %54 = vector.extract_strided_slice %3 {offsets = [0, 0, 0], sizes = [16, 4, 4], strides = [1, 1, 1]} : vector<16x8x4xf32> to vector<16x4x4xf32>
    %55 = tpu.concatenate %54, %34 in 1 : vector<16x4x4xf32>, vector<16x16x4xf32> -> vector<16x20x4xf32>
    %56 = vector.extract_strided_slice %55 {offsets = [0, 1, 0], sizes = [16, 19, 4], strides = [1, 1, 1]} : vector<16x20x4xf32> to vector<16x19x4xf32>
    %57 = vector.extract_strided_slice %3 {offsets = [0, 0, 0], sizes = [16, 1, 4], strides = [1, 1, 1]} : vector<16x8x4xf32> to vector<16x1x4xf32>
    %58 = tpu.concatenate %56, %57 in 1 : vector<16x19x4xf32>, vector<16x1x4xf32> -> vector<16x20x4xf32>
    %59 = arith.maximumf %55, %58 : vector<16x20x4xf32>
    %60 = vector.extract_strided_slice %59 {offsets = [0, 2, 0], sizes = [16, 18, 4], strides = [1, 1, 1]} : vector<16x20x4xf32> to vector<16x18x4xf32>
    %61 = vector.extract_strided_slice %3 {offsets = [0, 0, 0], sizes = [16, 2, 4], strides = [1, 1, 1]} : vector<16x8x4xf32> to vector<16x2x4xf32>
    %62 = tpu.concatenate %60, %61 in 1 : vector<16x18x4xf32>, vector<16x2x4xf32> -> vector<16x20x4xf32>
    %63 = arith.maximumf %59, %62 : vector<16x20x4xf32>
    %64 = vector.extract_strided_slice %63 {offsets = [0, 4, 0], sizes = [16, 16, 4], strides = [1, 1, 1]} : vector<16x20x4xf32> to vector<16x16x4xf32>
    %65 = vector.extract_strided_slice %3 {offsets = [0, 0, 0], sizes = [16, 4, 4], strides = [1, 1, 1]} : vector<16x8x4xf32> to vector<16x4x4xf32>
    %66 = tpu.concatenate %64, %65 in 1 : vector<16x16x4xf32>, vector<16x4x4xf32> -> vector<16x20x4xf32>
    %67 = arith.maximumf %63, %66 : vector<16x20x4xf32>
    %68 = vector.extract_strided_slice %55 {offsets = [0, 8, 0], sizes = [16, 12, 4], strides = [1, 1, 1]} : vector<16x20x4xf32> to vector<16x12x4xf32>
    %69 = vector.extract_strided_slice %3 {offsets = [0, 0, 0], sizes = [16, 8, 4], strides = [1, 1, 1]} : vector<16x8x4xf32> to vector<16x8x4xf32>
    %70 = tpu.concatenate %68, %69 in 1 : vector<16x12x4xf32>, vector<16x8x4xf32> -> vector<16x20x4xf32>
    %71 = arith.maximumf %67, %70 : vector<16x20x4xf32>
    %72 = vector.extract_strided_slice %71 {offsets = [0, 0, 0], sizes = [16, 16, 4], strides = [1, 1, 1]} : vector<16x20x4xf32> to vector<16x16x4xf32>
    %c0_13 = arith.constant 0 : index
    %c2 = arith.constant 2 : index
    %c0_14 = arith.constant 0 : index
    %c0_15 = arith.constant 0 : index
    %c0_16 = arith.constant 0 : index
    %73 = vector.load %arg3[%c0_13, %c2, %c0_14, %c0_15, %c0_16] : memref<1x4x16x16x4xf32, #tpu.memory_space<vmem>>, vector<1x1x16x16x4xf32>
    %74 = vector.shape_cast %73 : vector<1x1x16x16x4xf32> to vector<16x16x4xf32>
    %75 = vector.shape_cast %72 : vector<16x16x4xf32> to vector<1x1x16x16x4xf32>
    tpu.vector_store %arg3[%c0_13, %c2, %c0_14, %c0_15, %c0_16], %75 {strides = array<i32>} : memref<1x4x16x16x4xf32, #tpu.memory_space<vmem>>, vector<1x1x16x16x4xf32>,
    %76 = vector.extract_strided_slice %3 {offsets = [0, 0, 0], sizes = [16, 6, 4], strides = [1, 1, 1]} : vector<16x8x4xf32> to vector<16x6x4xf32>
    %77 = tpu.concatenate %76, %35 in 1 : vector<16x6x4xf32>, vector<16x16x4xf32> -> vector<16x22x4xf32>
    %78 = vector.extract_strided_slice %77 {offsets = [0, 1, 0], sizes = [16, 21, 4], strides = [1, 1, 1]} : vector<16x22x4xf32> to vector<16x21x4xf32>
    %79 = vector.extract_strided_slice %3 {offsets = [0, 0, 0], sizes = [16, 1, 4], strides = [1, 1, 1]} : vector<16x8x4xf32> to vector<16x1x4xf32>
    %80 = tpu.concatenate %78, %79 in 1 : vector<16x21x4xf32>, vector<16x1x4xf32> -> vector<16x22x4xf32>
    %81 = arith.maximumf %77, %80 : vector<16x22x4xf32>
    %82 = vector.extract_strided_slice %81 {offsets = [0, 2, 0], sizes = [16, 20, 4], strides = [1, 1, 1]} : vector<16x22x4xf32> to vector<16x20x4xf32>
    %83 = vector.extract_strided_slice %3 {offsets = [0, 0, 0], sizes = [16, 2, 4], strides = [1, 1, 1]} : vector<16x8x4xf32> to vector<16x2x4xf32>
    %84 = tpu.concatenate %82, %83 in 1 : vector<16x20x4xf32>, vector<16x2x4xf32> -> vector<16x22x4xf32>
    %85 = arith.maximumf %81, %84 : vector<16x22x4xf32>
    %86 = vector.extract_strided_slice %85 {offsets = [0, 4, 0], sizes = [16, 18, 4], strides = [1, 1, 1]} : vector<16x22x4xf32> to vector<16x18x4xf32>
    %87 = vector.extract_strided_slice %3 {offsets = [0, 0, 0], sizes = [16, 4, 4], strides = [1, 1, 1]} : vector<16x8x4xf32> to vector<16x4x4xf32>
    %88 = tpu.concatenate %86, %87 in 1 : vector<16x18x4xf32>, vector<16x4x4xf32> -> vector<16x22x4xf32>
    %89 = arith.maximumf %85, %88 : vector<16x22x4xf32>
    %90 = vector.extract_strided_slice %77 {offsets = [0, 4, 0], sizes = [16, 18, 4], strides = [1, 1, 1]} : vector<16x22x4xf32> to vector<16x18x4xf32>
    %91 = vector.extract_strided_slice %3 {offsets = [0, 0, 0], sizes = [16, 4, 4], strides = [1, 1, 1]} : vector<16x8x4xf32> to vector<16x4x4xf32>
    %92 = tpu.concatenate %90, %91 in 1 : vector<16x18x4xf32>, vector<16x4x4xf32> -> vector<16x22x4xf32>
    %93 = arith.maximumf %85, %92 : vector<16x22x4xf32>
    %94 = vector.extract_strided_slice %93 {offsets = [0, 8, 0], sizes = [16, 14, 4], strides = [1, 1, 1]} : vector<16x22x4xf32> to vector<16x14x4xf32>
    %95 = vector.extract_strided_slice %3 {offsets = [0, 0, 0], sizes = [16, 8, 4], strides = [1, 1, 1]} : vector<16x8x4xf32> to vector<16x8x4xf32>
    %96 = tpu.concatenate %94, %95 in 1 : vector<16x14x4xf32>, vector<16x8x4xf32> -> vector<16x22x4xf32>
    %97 = arith.maximumf %89, %96 : vector<16x22x4xf32>
    %98 = vector.extract_strided_slice %97 {offsets = [0, 0, 0], sizes = [16, 16, 4], strides = [1, 1, 1]} : vector<16x22x4xf32> to vector<16x16x4xf32>
    %c0_17 = arith.constant 0 : index
    %c3 = arith.constant 3 : index
    %c0_18 = arith.constant 0 : index
    %c0_19 = arith.constant 0 : index
    %c0_20 = arith.constant 0 : index
    %99 = vector.load %arg3[%c0_17, %c3, %c0_18, %c0_19, %c0_20] : memref<1x4x16x16x4xf32, #tpu.memory_space<vmem>>, vector<1x1x16x16x4xf32>
    %100 = vector.shape_cast %99 : vector<1x1x16x16x4xf32> to vector<16x16x4xf32>
    %101 = vector.shape_cast %98 : vector<16x16x4xf32> to vector<1x1x16x16x4xf32>
    tpu.vector_store %arg3[%c0_17, %c3, %c0_18, %c0_19, %c0_20], %101 {strides = array<i32>} : memref<1x4x16x16x4xf32, #tpu.memory_space<vmem>>, vector<1x1x16x16x4xf32>,
    return
  }
  func.func @transform_0(%arg0: i32, %arg1: i32) -> (i32, i32, i32, i32) {
    %c0_i32 = arith.constant 0 : i32
    %c0_i32_0 = arith.constant 0 : i32
    %c0_i32_1 = arith.constant 0 : i32
    return %arg0, %c0_i32, %c0_i32_0, %arg1 : i32, i32, i32, i32
  }
  func.func @transform_1(%arg0: i32, %arg1: i32) -> (i32, i32, i32, i32, i32) {
    %c0_i32 = arith.constant 0 : i32
    %c0_i32_0 = arith.constant 0 : i32
    %c0_i32_1 = arith.constant 0 : i32
    %c0_i32_2 = arith.constant 0 : i32
    return %arg0, %c0_i32, %c0_i32_0, %c0_i32_1, %arg1 : i32, i32, i32, i32, i32
  }
}

</mosaic_0001>

<llo_original>
// kernel: tpu_custom_call.1
$region0: #{tpu_custom_call.1}
  #allocation0 [shape = 'u32[]', space=smem, size = 0x4, offset = 0x4, fixed_abs, tag = 'smem constant byte address 0x4 - core index']
  #allocation1 [shape = 'u32[72,128]{1,0:T(1,128)}', space=vmem, size = 0x9000, scoped, tag = 'internal scratch']
  %s0 = inlined_call_operand.vmem [shape: f32[2,16,16,4], index: 0, kind: input, shape index: {}]
  %s1 = inlined_call_operand.vmem [shape: f32[2,4,16,16,4], index: 1, kind: output, shape index: {}]
  %s2 = sld [smem:[#allocation0]]
  $region37: #{tpu_custom_call.1} parent=0
    _
  %s4 = ssub.s32 1, %s2
  %s5 = scalar_select 0, %s4, %s2
  loop: start=0, step=1, limit=4
  $region2: #{tpu_custom_call.1} parent=0 // loop_pre_header
    _
  $region3: #{tpu_custom_call.1} parent=0 // loop_header
    %s7 = sphi 0, %s11
    %p8 = scmp.ge.s32.totalorder %s7, 4
    %s14 = sphi 0, %s26
    %s15 = sphi 0, %s22
    %s16 = sphi 0, %s14
    %s17 = sphi 0, %s15
    %s18 = sphi 0, %s16
    %s19 = sphi 0, %s17
    %s31 = sphi 0, %s33
    %s34 = sphi 0, %s31
    %s35 = sphi 0, %s34
    %s51 = sphi 0, %s35
    %s59 = sphi 0, %s61
    %s62 = sphi 0, %s59
    %s63 = sphi 0, %s62
    %s79 = sphi 0, %s63
  $region4: #{tpu_custom_call.1} parent=0 // loop_header_branch
    %10 = sbr.rel (%p8) target = $region8
  $region5: #{tpu_custom_call.1} parent=0 // loop_body
    %s12 = ssub.s32 %s7, 1
    %s13 = ssub.s32 %s7, 2
    %s20 = sadd.s32 1, %s15
    %p21 = scmp.ge.s32.totalorder %s20, 1
    %s22 = scalar_select %p21, 0, %s20
    %s23 = sadd.s32 1, %s14
    %s24 = scalar_select %p21, %s23, %s14
    %p25 = scmp.ge.s32.totalorder %s24, 2
    %s26 = scalar_select %p25, 0, %s24
    %s27 = ssub.s32 %s14, %s26
    %s28 = ssub.s32 %s15, %s22
    %s29 = sor.u32 %s27, %s28
    %p30 = scmp.eq.s32.totalorder %s29, 0
    %s32 = sadd.s32 %s31, 1
    %s33 = scalar_select %p30, %s31, %s32
    %p36 = pneg %p30
    %p37 = scmp.eq.s32.totalorder %s7, 1
    %p38 = por %p36, %p37
    %p39 = scmp.ne.s32.totalorder %s31, %s34
    %p40 = scmp.eq.s32.totalorder %s7, 0
    %p41 = por %p39, %p40
    %p42 = scmp.ne.s32.totalorder %s31, %s34
    %p43 = scmp.eq.s32.totalorder %s12, 1
    %p44 = por %p42, %p43
    %p45 = scmp.ne.s32.totalorder %s34, %s35
    %p46 = scmp.eq.s32.totalorder %s12, 0
    %p47 = por %p45, %p46
    %p48 = scmp.ne.s32.totalorder %s34, %s35
    %p49 = scmp.eq.s32.totalorder %s13, 1
    %p50 = por %p48, %p49
    %p52 = scmp.ne.s32.totalorder %s35, %s51
    %p53 = scmp.eq.s32.totalorder %s13, 0
    %p54 = por %p52, %p53
    %s55 = ssub.s32 %s14, %s26
    %s56 = ssub.s32 %s15, %s22
    %s57 = sor.u32 %s55, %s56
    %p58 = scmp.eq.s32.totalorder %s57, 0
    %s60 = sadd.s32 %s59, 1
    %s61 = scalar_select %p58, %s59, %s60
    %p64 = pneg %p58
    %p65 = scmp.eq.s32.totalorder %s7, 1
    %p66 = por %p64, %p65
    %p67 = scmp.ne.s32.totalorder %s59, %s62
    %p68 = scmp.eq.s32.totalorder %s7, 0
    %p69 = por %p67, %p68
    %p70 = scmp.ne.s32.totalorder %s59, %s62
    %p71 = scmp.eq.s32.totalorder %s12, 1
    %p72 = por %p70, %p71
    %p73 = scmp.ne.s32.totalorder %s62, %s63
    %p74 = scmp.eq.s32.totalorder %s12, 0
    %p75 = por %p73, %p74
    %p76 = scmp.ne.s32.totalorder %s62, %s63
    %p77 = scmp.eq.s32.totalorder %s13, 1
    %p78 = por %p76, %p77
    %p80 = scmp.ne.s32.totalorder %s63, %s79
    %p81 = scmp.eq.s32.totalorder %s13, 0
    %p82 = por %p80, %p81
    %p83 = scmp.le.s32.totalorder 1, %s7
    %p84 = scmp.lt.s32.totalorder %s7, 3
    %p85 = pnand %p83, %p84
    %p86 = pneg %p85
    // Predicated region
    $region9: #{tpu_custom_call.1} parent=5 // pred_check
      _
    $region10: #{tpu_custom_call.1} parent=5 // pred_check_branch
      %88 = sbr.rel (%p85) target = $region12
    $region11: #{tpu_custom_call.1} parent=5 // pred_region
      %s89 = ssub.s32 %s7, 1
    $region12: #{tpu_custom_call.1} parent=5 // pred_fallthru
      _
    %p90 = scmp.lt.s32.totalorder %s7, 2
    // Predicated region
    $region13: #{tpu_custom_call.1} parent=5 // pred_check
      %p91 = pneg %p90
    $region14: #{tpu_custom_call.1} parent=5 // pred_check_branch
      %93 = sbr.rel (%p91) target = $region16
    $region15: #{tpu_custom_call.1} parent=5 // pred_region
      // Predicated region
      $region17: #{tpu_custom_call.1} parent=15 // pred_check
        %p94 = pneg %p41
      $region18: #{tpu_custom_call.1} parent=15 // pred_check_branch
        %96 = sbr.rel (%p94) target = $region20
      $region19: #{tpu_custom_call.1} parent=15 // pred_region
        %p97 = scmp.lt.s32.totalorder %s14, 1
        %s98 = scalar_select %p97, %s14, 1
        %p99 = scmp.lt.s32.totalorder %s15, 0
        %s100 = scalar_select %p99, %s15, 0
        %s101 = smul.addr %s98, 32
        %s102 = sadd.s32 %s100, %s101
        %s103 = smul.addr %s102, 8
        %s104 = scalar_lea.vmem %s0, %s103
      $region20: #{tpu_custom_call.1} parent=15 // pred_fallthru
        _
    $region16: #{tpu_custom_call.1} parent=5 // pred_fallthru
      _
    %p105 = scmp.le.s32.totalorder 1, %s7
    %p106 = scmp.lt.s32.totalorder %s7, 3
    %p107 = pnand %p105, %p106
    %p108 = pneg %p107
    // Predicated region
    $region21: #{tpu_custom_call.1} parent=5 // pred_check
      _
    $region22: #{tpu_custom_call.1} parent=5 // pred_check_branch
      %110 = sbr.rel (%p107) target = $region24
    $region23: #{tpu_custom_call.1} parent=5 // pred_region
      %s111 = ssub.s32 %s7, 1
      %p112 = scmp.lt.s32.totalorder %s16, 1
      %s113 = scalar_select %p112, %s16, 1
      %p114 = scmp.lt.s32.totalorder %s17, 0
      %s115 = scalar_select %p114, %s17, 0
      %s116 = smul.addr %s113, 32
      %s117 = sadd.s32 %s115, %s116
      %s118 = smul.addr %s117, 8
      %s119 = scalar_lea.vmem %s0, %s118
      %p120 = pneg %p47
      %p121 = pneg %p44
      %p122 = pneg %p75
      %p123 = pneg %p72
      %p124 = scmp.lt.s32.totalorder %s16, 1
      %s125 = scalar_select %p124, %s16, 1
      %p126 = scmp.lt.s32.totalorder %s17, 0
      %s127 = scalar_select %p126, %s17, 0
      %s128 = smul.addr %s125, 128
      %s129 = sadd.s32 %s127, %s128
      %s130 = smul.addr %s129, 8
      %s131 = scalar_lea.vmem %s1, %s130
      %p132 = scmp.lt.s32.totalorder %s16, 1
      %s133 = scalar_select %p132, %s16, 1
      %p134 = scmp.lt.s32.totalorder %s17, 0
      %s135 = scalar_select %p134, %s17, 0
      %s136 = smul.addr %s133, 32
      %s137 = sadd.s32 %s135, %s136
      %s138 = smul.addr %s137, 8
      %s139 = scalar_lea.vmem %s0, %s138
      %p140 = scmp.lt.s32.totalorder %s16, 1
      %s141 = scalar_select %p140, %s16, 1
      %p142 = scmp.lt.s32.totalorder %s17, 0
      %s143 = scalar_select %p142, %s17, 0
      %s144 = smul.addr %s141, 128
      %s145 = sadd.s32 %s143, %s144
      %s146 = smul.addr %s145, 8
      %s147 = scalar_lea.vmem %s1, %s146
      %v148 = vld [vmem:[%s139] sm:$0xff]
      %v149 = vld [vmem:[%s139 + $0x8] sm:$0xff]
      %v150 = vld [vmem:[%s139 + $0x10] sm:$0xff]
      %v151 = vld [vmem:[%s139 + $0x18] sm:$0xff]
      %v152 = vld [vmem:[%s139 + $0x20] sm:$0xff]
      %v153 = vld [vmem:[%s139 + $0x28] sm:$0xff]
      %v154 = vld [vmem:[%s139 + $0x30] sm:$0xff]
      %v155 = vld [vmem:[%s139 + $0x38] sm:$0xff]
      %v156 = vld [vmem:[%s139 + $0x40] sm:$0xff]
      %v157 = vld [vmem:[%s139 + $0x48] sm:$0xff]
      %v158 = vld [vmem:[%s139 + $0x50] sm:$0xff]
      %v159 = vld [vmem:[%s139 + $0x58] sm:$0xff]
      %v160 = vld [vmem:[%s139 + $0x60] sm:$0xff]
      %v161 = vld [vmem:[%s139 + $0x68] sm:$0xff]
      %v162 = vld [vmem:[%s139 + $0x70] sm:$0xff]
      %v163 = vld [vmem:[%s139 + $0x78] sm:$0xff]
      %v164 = vld [vmem:[%s139 + $0x80] sm:$0xff]
      %v165 = vld [vmem:[%s139 + $0x88] sm:$0xff]
      %v166 = vld [vmem:[%s139 + $0x90] sm:$0xff]
      %v167 = vld [vmem:[%s139 + $0x98] sm:$0xff]
      %v168 = vld [vmem:[%s139 + $0xa0] sm:$0xff]
      %v169 = vld [vmem:[%s139 + $0xa8] sm:$0xff]
      %v170 = vld [vmem:[%s139 + $0xb0] sm:$0xff]
      %v171 = vld [vmem:[%s139 + $0xb8] sm:$0xff]
      %v172 = vld [vmem:[%s139 + $0xc0] sm:$0xff]
      %v173 = vld [vmem:[%s139 + $0xc8] sm:$0xff]
      %v174 = vld [vmem:[%s139 + $0xd0] sm:$0xff]
      %v175 = vld [vmem:[%s139 + $0xd8] sm:$0xff]
      %v176 = vld [vmem:[%s139 + $0xe0] sm:$0xff]
      %v177 = vld [vmem:[%s139 + $0xe8] sm:$0xff]
      %v178 = vld [vmem:[%s139 + $0xf0] sm:$0xff]
      %v179 = vld [vmem:[%s139 + $0xf8] sm:$0xff]
      %vm180 = vcmask 31744
      %181 = vst.msk [vmem:[%s147] sm:$0xff] %vm180, %v148
      %182 = vst.msk [vmem:[%s147 + $0x8] sm:$0xff] %vm180, %v149
      %183 = vst.msk [vmem:[%s147 + $0x10] sm:$0xff] %vm180, %v150
      %184 = vst.msk [vmem:[%s147 + $0x18] sm:$0xff] %vm180, %v151
      %185 = vst.msk [vmem:[%s147 + $0x20] sm:$0xff] %vm180, %v152
      %186 = vst.msk [vmem:[%s147 + $0x28] sm:$0xff] %vm180, %v153
      %187 = vst.msk [vmem:[%s147 + $0x30] sm:$0xff] %vm180, %v154
      %188 = vst.msk [vmem:[%s147 + $0x38] sm:$0xff] %vm180, %v155
      %189 = vst.msk [vmem:[%s147 + $0x40] sm:$0xff] %vm180, %v156
      %190 = vst.msk [vmem:[%s147 + $0x48] sm:$0xff] %vm180, %v157
      %191 = vst.msk [vmem:[%s147 + $0x50] sm:$0xff] %vm180, %v158
      %192 = vst.msk [vmem:[%s147 + $0x58] sm:$0xff] %vm180, %v159
      %193 = vst.msk [vmem:[%s147 + $0x60] sm:$0xff] %vm180, %v160
      %194 = vst.msk [vmem:[%s147 + $0x68] sm:$0xff] %vm180, %v161
      %195 = vst.msk [vmem:[%s147 + $0x70] sm:$0xff] %vm180, %v162
      %196 = vst.msk [vmem:[%s147 + $0x78] sm:$0xff] %vm180, %v163
      %197 = vst.msk [vmem:[%s147 + $0x80] sm:$0xff] %vm180, %v164
      %198 = vst.msk [vmem:[%s147 + $0x88] sm:$0xff] %vm180, %v165
      %199 = vst.msk [vmem:[%s147 + $0x90] sm:$0xff] %vm180, %v166
      %200 = vst.msk [vmem:[%s147 + $0x98] sm:$0xff] %vm180, %v167
      %201 = vst.msk [vmem:[%s147 + $0xa0] sm:$0xff] %vm180, %v168
      %202 = vst.msk [vmem:[%s147 + $0xa8] sm:$0xff] %vm180, %v169
      %203 = vst.msk [vmem:[%s147 + $0xb0] sm:$0xff] %vm180, %v170
      %204 = vst.msk [vmem:[%s147 + $0xb8] sm:$0xff] %vm180, %v171
      %205 = vst.msk [vmem:[%s147 + $0xc0] sm:$0xff] %vm180, %v172
      %206 = vst.msk [vmem:[%s147 + $0xc8] sm:$0xff] %vm180, %v173
      %207 = vst.msk [vmem:[%s147 + $0xd0] sm:$0xff] %vm180, %v174
      %208 = vst.msk [vmem:[%s147 + $0xd8] sm:$0xff] %vm180, %v175
      %209 = vst.msk [vmem:[%s147 + $0xe0] sm:$0xff] %vm180, %v176
      %210 = vst.msk [vmem:[%s147 + $0xe8] sm:$0xff] %vm180, %v177
      %211 = vst.msk [vmem:[%s147 + $0xf0] sm:$0xff] %vm180, %v178
      %212 = vst.msk [vmem:[%s147 + $0xf8] sm:$0xff] %vm180, %v179
      %v213 = vmax.f32 %v148, %v150
      %v214 = vmax.f32 %v149, %v151
      %v215 = vmax.f32 %v150, %v152
      %v216 = vmax.f32 %v151, %v153
      %v217 = vmax.f32 %v152, %v154
      %v218 = vmax.f32 %v153, %v155
      %v219 = vmax.f32 %v154, %v156
      %v220 = vmax.f32 %v155, %v157
      %v221 = vmax.f32 %v156, %v158
      %v222 = vmax.f32 %v157, %v159
      %v223 = vmax.f32 %v158, %v160
      %v224 = vmax.f32 %v159, %v161
      %v225 = vmax.f32 %v160, %v162
      %v226 = vmax.f32 %v161, %v163
      %v227 = vmax.f32 %v162, %v164
      %v228 = vmax.f32 %v163, %v165
      %v229 = vmax.f32 %v164, %v166
      %v230 = vmax.f32 %v165, %v167
      %v231 = vmax.f32 %v166, %v168
      %v232 = vmax.f32 %v167, %v169
      %v233 = vmax.f32 %v168, %v170
      %v234 = vmax.f32 %v169, %v171
      %v235 = vmax.f32 %v170, %v172
      %v236 = vmax.f32 %v171, %v173
      %v237 = vmax.f32 %v172, %v174
      %v238 = vmax.f32 %v173, %v175
      %v239 = vmax.f32 %v174, %v176
      %v240 = vmax.f32 %v175, %v177
      %v241 = vmax.f32 %v176, %v178
      %v242 = vmax.f32 %v177, %v179
      %v243 = vmax.f32 %v148, %v215
      %v244 = vmax.f32 %v149, %v216
      %v245 = vmax.f32 %v213, %v217
      %v246 = vmax.f32 %v214, %v218
      %v247 = vmax.f32 %v215, %v219
      %v248 = vmax.f32 %v216, %v220
      %v249 = vmax.f32 %v217, %v221
      %v250 = vmax.f32 %v218, %v222
      %v251 = vmax.f32 %v219, %v223
      %v252 = vmax.f32 %v220, %v224
      %v253 = vmax.f32 %v221, %v225
      %v254 = vmax.f32 %v222, %v226
      %v255 = vmax.f32 %v223, %v227
      %v256 = vmax.f32 %v224, %v228
      %v257 = vmax.f32 %v225, %v229
      %v258 = vmax.f32 %v226, %v230
      %v259 = vmax.f32 %v227, %v231
      %v260 = vmax.f32 %v228, %v232
      %v261 = vmax.f32 %v229, %v233
      %v262 = vmax.f32 %v230, %v234
      %v263 = vmax.f32 %v231, %v235
      %v264 = vmax.f32 %v232, %v236
      %v265 = vmax.f32 %v233, %v237
      %v266 = vmax.f32 %v234, %v238
      %v267 = vmax.f32 %v235, %v239
      %v268 = vmax.f32 %v236, %v240
      %v269 = vmax.f32 %v237, %v241
      %v270 = vmax.f32 %v238, %v242
      %v271 = vmax.f32 %v239, %v178
      %v272 = vmax.f32 %v240, %v179
      %v273 = vmax.f32 %v148, %v247
      %v274 = vmax.f32 %v149, %v248
      %v275 = vmax.f32 %v213, %v249
      %v276 = vmax.f32 %v214, %v250
      %v277 = vmax.f32 %v243, %v251
      %v278 = vmax.f32 %v244, %v252
      %v279 = vmax.f32 %v245, %v253
      %v280 = vmax.f32 %v246, %v254
      %v281 = vmax.f32 %v247, %v255
      %v282 = vmax.f32 %v248, %v256
      %v283 = vmax.f32 %v249, %v257
      %v284 = vmax.f32 %v250, %v258
      %v285 = vmax.f32 %v251, %v259
      %v286 = vmax.f32 %v252, %v260
      %v287 = vmax.f32 %v253, %v261
      %v288 = vmax.f32 %v254, %v262
      %v289 = vmax.f32 %v255, %v263
      %v290 = vmax.f32 %v256, %v264
      %v291 = vmax.f32 %v257, %v265
      %v292 = vmax.f32 %v258, %v266
      %v293 = vmax.f32 %v259, %v267
      %v294 = vmax.f32 %v260, %v268
      %v295 = vmax.f32 %v261, %v269
      %v296 = vmax.f32 %v262, %v270
      %v297 = vmax.f32 %v263, %v271
      %v298 = vmax.f32 %v264, %v272
      %v299 = vmax.f32 %v265, %v241
      %v300 = vmax.f32 %v266, %v242
      %v301 = vmax.f32 %v267, %v178
      %v302 = vmax.f32 %v268, %v179
      %v303 = vmax.f32 %v213, %v152
      %v304 = vmax.f32 %v214, %v153
      %v305 = vmax.f32 %v243, %v154
      %v306 = vmax.f32 %v244, %v155
      %v307 = vmax.f32 %v245, %v156
      %v308 = vmax.f32 %v246, %v157
      %v309 = vmax.f32 %v247, %v158
      %v310 = vmax.f32 %v248, %v159
      %v311 = vmax.f32 %v249, %v160
      %v312 = vmax.f32 %v250, %v161
      %v313 = vmax.f32 %v251, %v162
      %v314 = vmax.f32 %v252, %v163
      %v315 = vmax.f32 %v253, %v164
      %v316 = vmax.f32 %v254, %v165
      %v317 = vmax.f32 %v255, %v166
      %v318 = vmax.f32 %v256, %v167
      %v319 = vmax.f32 %v257, %v168
      %v320 = vmax.f32 %v258, %v169
      %v321 = vmax.f32 %v259, %v170
      %v322 = vmax.f32 %v260, %v171
      %v323 = vmax.f32 %v261, %v172
      %v324 = vmax.f32 %v262, %v173
      %v325 = vmax.f32 %v263, %v174
      %v326 = vmax.f32 %v264, %v175
      %v327 = vmax.f32 %v265, %v176
      %v328 = vmax.f32 %v266, %v177
      %v329 = vmax.f32 %v273, %v158
      %v330 = vmax.f32 %v274, %v159
      %v331 = vmax.f32 %v275, %v160
      %v332 = vmax.f32 %v276, %v161
      %v333 = vmax.f32 %v277, %v162
      %v334 = vmax.f32 %v278, %v163
      %v335 = vmax.f32 %v279, %v164
      %v336 = vmax.f32 %v280, %v165
      %v337 = vmax.f32 %v281, %v166
      %v338 = vmax.f32 %v282, %v167
      %v339 = vmax.f32 %v283, %v168
      %v340 = vmax.f32 %v284, %v169
      %v341 = vmax.f32 %v285, %v170
      %v342 = vmax.f32 %v286, %v171
      %v343 = vmax.f32 %v287, %v172
      %v344 = vmax.f32 %v288, %v173
      %v345 = vmax.f32 %v289, %v174
      %v346 = vmax.f32 %v290, %v175
      %v347 = vmax.f32 %v291, %v176
      %v348 = vmax.f32 %v292, %v177
      %v349 = vmax.f32 %v293, %v178
      %v350 = vmax.f32 %v294, %v179
      %v351 = vmax.f32 %v213, %v311
      %v352 = vmax.f32 %v214, %v312
      %v353 = vmax.f32 %v243, %v313
      %v354 = vmax.f32 %v244, %v314
      %v355 = vmax.f32 %v245, %v315
      %v356 = vmax.f32 %v246, %v316
      %v357 = vmax.f32 %v273, %v317
      %v358 = vmax.f32 %v274, %v318
      %v359 = vmax.f32 %v275, %v319
      %v360 = vmax.f32 %v276, %v320
      %v361 = vmax.f32 %v277, %v321
      %v362 = vmax.f32 %v278, %v322
      %v363 = vmax.f32 %v279, %v323
      %v364 = vmax.f32 %v280, %v324
      %v365 = vmax.f32 %v281, %v325
      %v366 = vmax.f32 %v282, %v326
      %v367 = vmax.f32 %v283, %v327
      %v368 = vmax.f32 %v284, %v328
      %v369 = vmax.f32 %v285, %v301
      %v370 = vmax.f32 %v286, %v302
      %v371 = vmax.f32 %v287, %v269
      %v372 = vmax.f32 %v288, %v270
      %v373 = vmax.f32 %v289, %v271
      %v374 = vmax.f32 %v290, %v272
      %v375 = vmax.f32 %v291, %v241
      %v376 = vmax.f32 %v292, %v242
      %vm409 = vcmask 1041408
      %v410 = vrot.slane %v303, 6
      %v411 = vrot.slane %v304, 6
      %v412 = vsel %vm409, %v410, %v411
      %v413 = vrot.slane %v305, 6
      %v414 = vrot.slane %v306, 6
      %v415 = vsel %vm409, %v413, %v414
      %v416 = vrot.slane %v307, 6
      %v417 = vrot.slane %v308, 6
      %v418 = vsel %vm409, %v416, %v417
      %v419 = vrot.slane %v309, 6
      %v420 = vrot.slane %v310, 6
      %v421 = vsel %vm409, %v419, %v420
      %v422 = vrot.slane %v311, 6
      %v423 = vrot.slane %v312, 6
      %v424 = vsel %vm409, %v422, %v423
      %v425 = vrot.slane %v313, 6
      %v426 = vrot.slane %v314, 6
      %v427 = vsel %vm409, %v425, %v426
      %v428 = vrot.slane %v315, 6
      %v429 = vrot.slane %v316, 6
      %v430 = vsel %vm409, %v428, %v429
      %v431 = vrot.slane %v317, 6
      %v432 = vrot.slane %v318, 6
      %v433 = vsel %vm409, %v431, %v432
      %v434 = vrot.slane %v319, 6
      %v435 = vrot.slane %v320, 6
      %v436 = vsel %vm409, %v434, %v435
      %v437 = vrot.slane %v321, 6
      %v438 = vrot.slane %v322, 6
      %v439 = vsel %vm409, %v437, %v438
      %v440 = vrot.slane %v323, 6
      %v441 = vrot.slane %v324, 6
      %v442 = vsel %vm409, %v440, %v441
      %v443 = vrot.slane %v325, 6
      %v444 = vrot.slane %v326, 6
      %v445 = vsel %vm409, %v443, %v444
      %v446 = vrot.slane %v327, 6
      %v447 = vrot.slane %v328, 6
      %v448 = vsel %vm409, %v446, %v447
      %v449 = vrot.slane %v301, 6
      %v450 = vrot.slane %v302, 6
      %v451 = vsel %vm409, %v449, %v450
      %v452 = vrot.slane %v269, 6
      %v453 = vrot.slane %v270, 6
      %v454 = vsel %vm409, %v452, %v453
      %v455 = vrot.slane %v271, 6
      %v456 = vrot.slane %v272, 6
      %v457 = vsel %vm409, %v455, %v456
      %v506 = vsel %vm409, -inf, %v410
      %v507 = vsel %vm409, -inf, %v413
      %v508 = vsel %vm409, -inf, %v416
      %v509 = vsel %vm409, -inf, %v419
      %v510 = vsel %vm409, -inf, %v422
      %v511 = vsel %vm409, -inf, %v425
      %v512 = vsel %vm409, -inf, %v428
      %v513 = vsel %vm409, -inf, %v431
      %v514 = vsel %vm409, -inf, %v434
      %v515 = vsel %vm409, -inf, %v437
      %v516 = vsel %vm409, -inf, %v440
      %v517 = vsel %vm409, -inf, %v443
      %v518 = vsel %vm409, -inf, %v446
      %v519 = vsel %vm409, -inf, %v449
      %v520 = vsel %vm409, -inf, %v452
      %v521 = vsel %vm409, -inf, %v455
      %vm538 = vcmask 1046528
      %v539 = vrot.slane %v506, 1
      %v540 = vrot.slane %v412, 1
      %v541 = vsel %vm538, %v539, %v540
      %v542 = vrot.slane %v411, 1
      %v543 = vsel %vm538, %v540, %v542
      %v544 = vrot.slane %v507, 1
      %v545 = vrot.slane %v415, 1
      %v546 = vsel %vm538, %v544, %v545
      %v547 = vrot.slane %v414, 1
      %v548 = vsel %vm538, %v545, %v547
      %v549 = vrot.slane %v508, 1
      %v550 = vrot.slane %v418, 1
      %v551 = vsel %vm538, %v549, %v550
      %v552 = vrot.slane %v417, 1
      %v553 = vsel %vm538, %v550, %v552
      %v554 = vrot.slane %v509, 1
      %v555 = vrot.slane %v421, 1
      %v556 = vsel %vm538, %v554, %v555
      %v557 = vrot.slane %v420, 1
      %v558 = vsel %vm538, %v555, %v557
      %v559 = vrot.slane %v510, 1
      %v560 = vrot.slane %v424, 1
      %v561 = vsel %vm538, %v559, %v560
      %v562 = vrot.slane %v423, 1
      %v563 = vsel %vm538, %v560, %v562
      %v564 = vrot.slane %v511, 1
      %v565 = vrot.slane %v427, 1
      %v566 = vsel %vm538, %v564, %v565
      %v567 = vrot.slane %v426, 1
      %v568 = vsel %vm538, %v565, %v567
      %v569 = vrot.slane %v512, 1
      %v570 = vrot.slane %v430, 1
      %v571 = vsel %vm538, %v569, %v570
      %v572 = vrot.slane %v429, 1
      %v573 = vsel %vm538, %v570, %v572
      %v574 = vrot.slane %v513, 1
      %v575 = vrot.slane %v433, 1
      %v576 = vsel %vm538, %v574, %v575
      %v577 = vrot.slane %v432, 1
      %v578 = vsel %vm538, %v575, %v577
      %v579 = vrot.slane %v514, 1
      %v580 = vrot.slane %v436, 1
      %v581 = vsel %vm538, %v579, %v580
      %v582 = vrot.slane %v435, 1
      %v583 = vsel %vm538, %v580, %v582
      %v584 = vrot.slane %v515, 1
      %v585 = vrot.slane %v439, 1
      %v586 = vsel %vm538, %v584, %v585
      %v587 = vrot.slane %v438, 1
      %v588 = vsel %vm538, %v585, %v587
      %v589 = vrot.slane %v516, 1
      %v590 = vrot.slane %v442, 1
      %v591 = vsel %vm538, %v589, %v590
      %v592 = vrot.slane %v441, 1
      %v593 = vsel %vm538, %v590, %v592
      %v594 = vrot.slane %v517, 1
      %v595 = vrot.slane %v445, 1
      %v596 = vsel %vm538, %v594, %v595
      %v597 = vrot.slane %v444, 1
      %v598 = vsel %vm538, %v595, %v597
      %v599 = vrot.slane %v518, 1
      %v600 = vrot.slane %v448, 1
      %v601 = vsel %vm538, %v599, %v600
      %v602 = vrot.slane %v447, 1
      %v603 = vsel %vm538, %v600, %v602
      %v604 = vrot.slane %v519, 1
      %v605 = vrot.slane %v451, 1
      %v606 = vsel %vm538, %v604, %v605
      %v607 = vrot.slane %v450, 1
      %v608 = vsel %vm538, %v605, %v607
      %v609 = vrot.slane %v520, 1
      %v610 = vrot.slane %v454, 1
      %v611 = vsel %vm538, %v609, %v610
      %v612 = vrot.slane %v453, 1
      %v613 = vsel %vm538, %v610, %v612
      %v614 = vrot.slane %v521, 1
      %v615 = vrot.slane %v457, 1
      %v616 = vsel %vm538, %v614, %v615
      %v617 = vrot.slane %v456, 1
      %v618 = vsel %vm538, %v615, %v617
      %vm667 = vcmask 1040384
      %v668 = vsel %vm667, %v542, -inf
      %v669 = vsel %vm667, %v547, -inf
      %v670 = vsel %vm667, %v552, -inf
      %v671 = vsel %vm667, %v557, -inf
      %v672 = vsel %vm667, %v562, -inf
      %v673 = vsel %vm667, %v567, -inf
      %v674 = vsel %vm667, %v572, -inf
      %v675 = vsel %vm667, %v577, -inf
      %v676 = vsel %vm667, %v582, -inf
      %v677 = vsel %vm667, %v587, -inf
      %v678 = vsel %vm667, %v592, -inf
      %v679 = vsel %vm667, %v597, -inf
      %v680 = vsel %vm667, %v602, -inf
      %v681 = vsel %vm667, %v607, -inf
      %v682 = vsel %vm667, %v612, -inf
      %v683 = vsel %vm667, %v617, -inf
      %v684 = vmax.f32 %v506, %v541
      %v685 = vmax.f32 %v412, %v543
      %v686 = vmax.f32 %v411, %v668
      %v687 = vmax.f32 %v507, %v546
      %v688 = vmax.f32 %v415, %v548
      %v689 = vmax.f32 %v414, %v669
      %v690 = vmax.f32 %v508, %v551
      %v691 = vmax.f32 %v418, %v553
      %v692 = vmax.f32 %v417, %v670
      %v693 = vmax.f32 %v509, %v556
      %v694 = vmax.f32 %v421, %v558
      %v695 = vmax.f32 %v420, %v671
      %v696 = vmax.f32 %v510, %v561
      %v697 = vmax.f32 %v424, %v563
      %v698 = vmax.f32 %v423, %v672
      %v699 = vmax.f32 %v511, %v566
      %v700 = vmax.f32 %v427, %v568
      %v701 = vmax.f32 %v426, %v673
      %v702 = vmax.f32 %v512, %v571
      %v703 = vmax.f32 %v430, %v573
      %v704 = vmax.f32 %v429, %v674
      %v705 = vmax.f32 %v513, %v576
      %v706 = vmax.f32 %v433, %v578
      %v707 = vmax.f32 %v432, %v675
      %v708 = vmax.f32 %v514, %v581
      %v709 = vmax.f32 %v436, %v583
      %v710 = vmax.f32 %v435, %v676
      %v711 = vmax.f32 %v515, %v586
      %v712 = vmax.f32 %v439, %v588
      %v713 = vmax.f32 %v438, %v677
      %v714 = vmax.f32 %v516, %v591
      %v715 = vmax.f32 %v442, %v593
      %v716 = vmax.f32 %v441, %v678
      %v717 = vmax.f32 %v517, %v596
      %v718 = vmax.f32 %v445, %v598
      %v719 = vmax.f32 %v444, %v679
      %v720 = vmax.f32 %v518, %v601
      %v721 = vmax.f32 %v448, %v603
      %v722 = vmax.f32 %v447, %v680
      %v723 = vmax.f32 %v519, %v606
      %v724 = vmax.f32 %v451, %v608
      %v725 = vmax.f32 %v450, %v681
      %v726 = vmax.f32 %v520, %v611
      %v727 = vmax.f32 %v454, %v613
      %v728 = vmax.f32 %v453, %v682
      %v729 = vmax.f32 %v521, %v616
      %v730 = vmax.f32 %v457, %v618
      %v731 = vmax.f32 %v456, %v683
      %vm780 = vcmask 1045504
      %v781 = vrot.slane %v684, 2
      %v782 = vrot.slane %v685, 2
      %v783 = vsel %vm780, %v781, %v782
      %v784 = vrot.slane %v686, 2
      %v785 = vsel %vm780, %v782, %v784
      %v786 = vrot.slane %v687, 2
      %v787 = vrot.slane %v688, 2
      %v788 = vsel %vm780, %v786, %v787
      %v789 = vrot.slane %v689, 2
      %v790 = vsel %vm780, %v787, %v789
      %v791 = vrot.slane %v690, 2
      %v792 = vrot.slane %v691, 2
      %v793 = vsel %vm780, %v791, %v792
      %v794 = vrot.slane %v692, 2
      %v795 = vsel %vm780, %v792, %v794
      %v796 = vrot.slane %v693, 2
      %v797 = vrot.slane %v694, 2
      %v798 = vsel %vm780, %v796, %v797
      %v799 = vrot.slane %v695, 2
      %v800 = vsel %vm780, %v797, %v799
      %v801 = vrot.slane %v696, 2
      %v802 = vrot.slane %v697, 2
      %v803 = vsel %vm780, %v801, %v802
      %v804 = vrot.slane %v698, 2
      %v805 = vsel %vm780, %v802, %v804
      %v806 = vrot.slane %v699, 2
      %v807 = vrot.slane %v700, 2
      %v808 = vsel %vm780, %v806, %v807
      %v809 = vrot.slane %v701, 2
      %v810 = vsel %vm780, %v807, %v809
      %v811 = vrot.slane %v702, 2
      %v812 = vrot.slane %v703, 2
      %v813 = vsel %vm780, %v811, %v812
      %v814 = vrot.slane %v704, 2
      %v815 = vsel %vm780, %v812, %v814
      %v816 = vrot.slane %v705, 2
      %v817 = vrot.slane %v706, 2
      %v818 = vsel %vm780, %v816, %v817
      %v819 = vrot.slane %v707, 2
      %v820 = vsel %vm780, %v817, %v819
      %v821 = vrot.slane %v708, 2
      %v822 = vrot.slane %v709, 2
      %v823 = vsel %vm780, %v821, %v822
      %v824 = vrot.slane %v710, 2
      %v825 = vsel %vm780, %v822, %v824
      %v826 = vrot.slane %v711, 2
      %v827 = vrot.slane %v712, 2
      %v828 = vsel %vm780, %v826, %v827
      %v829 = vrot.slane %v713, 2
      %v830 = vsel %vm780, %v827, %v829
      %v831 = vrot.slane %v714, 2
      %v832 = vrot.slane %v715, 2
      %v833 = vsel %vm780, %v831, %v832
      %v834 = vrot.slane %v716, 2
      %v835 = vsel %vm780, %v832, %v834
      %v836 = vrot.slane %v717, 2
      %v837 = vrot.slane %v718, 2
      %v838 = vsel %vm780, %v836, %v837
      %v839 = vrot.slane %v719, 2
      %v840 = vsel %vm780, %v837, %v839
      %v841 = vrot.slane %v720, 2
      %v842 = vrot.slane %v721, 2
      %v843 = vsel %vm780, %v841, %v842
      %v844 = vrot.slane %v722, 2
      %v845 = vsel %vm780, %v842, %v844
      %v846 = vrot.slane %v723, 2
      %v847 = vrot.slane %v724, 2
      %v848 = vsel %vm780, %v846, %v847
      %v849 = vrot.slane %v725, 2
      %v850 = vsel %vm780, %v847, %v849
      %v851 = vrot.slane %v726, 2
      %v852 = vrot.slane %v727, 2
      %v853 = vsel %vm780, %v851, %v852
      %v854 = vrot.slane %v728, 2
      %v855 = vsel %vm780, %v852, %v854
      %v856 = vrot.slane %v729, 2
      %v857 = vrot.slane %v730, 2
      %v858 = vsel %vm780, %v856, %v857
      %v859 = vrot.slane %v731, 2
      %v860 = vsel %vm780, %v857, %v859
      %v893 = vmax.f32 %v684, %v783
      %v894 = vmax.f32 %v685, %v785
      %v895 = vmax.f32 %v687, %v788
      %v896 = vmax.f32 %v688, %v790
      %v897 = vmax.f32 %v690, %v793
      %v898 = vmax.f32 %v691, %v795
      %v899 = vmax.f32 %v693, %v798
      %v900 = vmax.f32 %v694, %v800
      %v901 = vmax.f32 %v696, %v803
      %v902 = vmax.f32 %v697, %v805
      %v903 = vmax.f32 %v699, %v808
      %v904 = vmax.f32 %v700, %v810
      %v905 = vmax.f32 %v702, %v813
      %v906 = vmax.f32 %v703, %v815
      %v907 = vmax.f32 %v705, %v818
      %v908 = vmax.f32 %v706, %v820
      %v909 = vmax.f32 %v708, %v823
      %v910 = vmax.f32 %v709, %v825
      %v911 = vmax.f32 %v711, %v828
      %v912 = vmax.f32 %v712, %v830
      %v913 = vmax.f32 %v714, %v833
      %v914 = vmax.f32 %v715, %v835
      %v915 = vmax.f32 %v717, %v838
      %v916 = vmax.f32 %v718, %v840
      %v917 = vmax.f32 %v720, %v843
      %v918 = vmax.f32 %v721, %v845
      %v919 = vmax.f32 %v723, %v848
      %v920 = vmax.f32 %v724, %v850
      %v921 = vmax.f32 %v726, %v853
      %v922 = vmax.f32 %v727, %v855
      %v923 = vmax.f32 %v729, %v858
      %v924 = vmax.f32 %v730, %v860
      %vm925 = vcmask 1043456
      %v926 = vrot.slane %v506, 4
      %v927 = vrot.slane %v412, 4
      %v928 = vsel %vm925, %v926, %v927
      %v929 = vrot.slane %v411, 4
      %v930 = vsel %vm925, %v927, %v929
      %v931 = vrot.slane %v507, 4
      %v932 = vrot.slane %v415, 4
      %v933 = vsel %vm925, %v931, %v932
      %v934 = vrot.slane %v414, 4
      %v935 = vsel %vm925, %v932, %v934
      %v936 = vrot.slane %v508, 4
      %v937 = vrot.slane %v418, 4
      %v938 = vsel %vm925, %v936, %v937
      %v939 = vrot.slane %v417, 4
      %v940 = vsel %vm925, %v937, %v939
      %v941 = vrot.slane %v509, 4
      %v942 = vrot.slane %v421, 4
      %v943 = vsel %vm925, %v941, %v942
      %v944 = vrot.slane %v420, 4
      %v945 = vsel %vm925, %v942, %v944
      %v946 = vrot.slane %v510, 4
      %v947 = vrot.slane %v424, 4
      %v948 = vsel %vm925, %v946, %v947
      %v949 = vrot.slane %v423, 4
      %v950 = vsel %vm925, %v947, %v949
      %v951 = vrot.slane %v511, 4
      %v952 = vrot.slane %v427, 4
      %v953 = vsel %vm925, %v951, %v952
      %v954 = vrot.slane %v426, 4
      %v955 = vsel %vm925, %v952, %v954
      %v956 = vrot.slane %v512, 4
      %v957 = vrot.slane %v430, 4
      %v958 = vsel %vm925, %v956, %v957
      %v959 = vrot.slane %v429, 4
      %v960 = vsel %vm925, %v957, %v959
      %v961 = vrot.slane %v513, 4
      %v962 = vrot.slane %v433, 4
      %v963 = vsel %vm925, %v961, %v962
      %v964 = vrot.slane %v432, 4
      %v965 = vsel %vm925, %v962, %v964
      %v966 = vrot.slane %v514, 4
      %v967 = vrot.slane %v436, 4
      %v968 = vsel %vm925, %v966, %v967
      %v969 = vrot.slane %v435, 4
      %v970 = vsel %vm925, %v967, %v969
      %v971 = vrot.slane %v515, 4
      %v972 = vrot.slane %v439, 4
      %v973 = vsel %vm925, %v971, %v972
      %v974 = vrot.slane %v438, 4
      %v975 = vsel %vm925, %v972, %v974
      %v976 = vrot.slane %v516, 4
      %v977 = vrot.slane %v442, 4
      %v978 = vsel %vm925, %v976, %v977
      %v979 = vrot.slane %v441, 4
      %v980 = vsel %vm925, %v977, %v979
      %v981 = vrot.slane %v517, 4
      %v982 = vrot.slane %v445, 4
      %v983 = vsel %vm925, %v981, %v982
      %v984 = vrot.slane %v444, 4
      %v985 = vsel %vm925, %v982, %v984
      %v986 = vrot.slane %v518, 4
      %v987 = vrot.slane %v448, 4
      %v988 = vsel %vm925, %v986, %v987
      %v989 = vrot.slane %v447, 4
      %v990 = vsel %vm925, %v987, %v989
      %v991 = vrot.slane %v519, 4
      %v992 = vrot.slane %v451, 4
      %v993 = vsel %vm925, %v991, %v992
      %v994 = vrot.slane %v450, 4
      %v995 = vsel %vm925, %v992, %v994
      %v996 = vrot.slane %v520, 4
      %v997 = vrot.slane %v454, 4
      %v998 = vsel %vm925, %v996, %v997
      %v999 = vrot.slane %v453, 4
      %v1000 = vsel %vm925, %v997, %v999
      %v1001 = vrot.slane %v521, 4
      %v1002 = vrot.slane %v457, 4
      %v1003 = vsel %vm925, %v1001, %v1002
      %v1004 = vrot.slane %v456, 4
      %v1005 = vsel %vm925, %v1002, %v1004
      %v1038 = vsel %vm780, %v930, -inf
      %v1039 = vsel %vm780, %v935, -inf
      %v1040 = vsel %vm780, %v940, -inf
      %v1041 = vsel %vm780, %v945, -inf
      %v1042 = vsel %vm780, %v950, -inf
      %v1043 = vsel %vm780, %v955, -inf
      %v1044 = vsel %vm780, %v960, -inf
      %v1045 = vsel %vm780, %v965, -inf
      %v1046 = vsel %vm780, %v970, -inf
      %v1047 = vsel %vm780, %v975, -inf
      %v1048 = vsel %vm780, %v980, -inf
      %v1049 = vsel %vm780, %v985, -inf
      %v1050 = vsel %vm780, %v990, -inf
      %v1051 = vsel %vm780, %v995, -inf
      %v1052 = vsel %vm780, %v1000, -inf
      %v1053 = vsel %vm780, %v1005, -inf
      %v1054 = vmax.f32 %v893, %v928
      %v1055 = vmax.f32 %v894, %v1038
      %v1056 = vmax.f32 %v895, %v933
      %v1057 = vmax.f32 %v896, %v1039
      %v1058 = vmax.f32 %v897, %v938
      %v1059 = vmax.f32 %v898, %v1040
      %v1060 = vmax.f32 %v899, %v943
      %v1061 = vmax.f32 %v900, %v1041
      %v1062 = vmax.f32 %v901, %v948
      %v1063 = vmax.f32 %v902, %v1042
      %v1064 = vmax.f32 %v903, %v953
      %v1065 = vmax.f32 %v904, %v1043
      %v1066 = vmax.f32 %v905, %v958
      %v1067 = vmax.f32 %v906, %v1044
      %v1068 = vmax.f32 %v907, %v963
      %v1069 = vmax.f32 %v908, %v1045
      %v1070 = vmax.f32 %v909, %v968
      %v1071 = vmax.f32 %v910, %v1046
      %v1072 = vmax.f32 %v911, %v973
      %v1073 = vmax.f32 %v912, %v1047
      %v1074 = vmax.f32 %v913, %v978
      %v1075 = vmax.f32 %v914, %v1048
      %v1076 = vmax.f32 %v915, %v983
      %v1077 = vmax.f32 %v916, %v1049
      %v1078 = vmax.f32 %v917, %v988
      %v1079 = vmax.f32 %v918, %v1050
      %v1080 = vmax.f32 %v919, %v993
      %v1081 = vmax.f32 %v920, %v1051
      %v1082 = vmax.f32 %v921, %v998
      %v1083 = vmax.f32 %v922, %v1052
      %v1084 = vmax.f32 %v923, %v1003
      %v1085 = vmax.f32 %v924, %v1053
      %s1086 = scalar_lea.vmem %s147, 256
      %1087 = vst.msk [vmem:[%s1086] sm:$0xff] %vm180, %v1054
      %1088 = vst.msk [vmem:[%s1086 + $0x8] sm:$0xff] %vm180, %v1055
      %1089 = vst.msk [vmem:[%s1086 + $0x10] sm:$0xff] %vm180, %v1056
      %1090 = vst.msk [vmem:[%s1086 + $0x18] sm:$0xff] %vm180, %v1057
      %1091 = vst.msk [vmem:[%s1086 + $0x20] sm:$0xff] %vm180, %v1058
      %1092 = vst.msk [vmem:[%s1086 + $0x28] sm:$0xff] %vm180, %v1059
      %1093 = vst.msk [vmem:[%s1086 + $0x30] sm:$0xff] %vm180, %v1060
      %1094 = vst.msk [vmem:[%s1086 + $0x38] sm:$0xff] %vm180, %v1061
      %1095 = vst.msk [vmem:[%s1086 + $0x40] sm:$0xff] %vm180, %v1062
      %1096 = vst.msk [vmem:[%s1086 + $0x48] sm:$0xff] %vm180, %v1063
      %1097 = vst.msk [vmem:[%s1086 + $0x50] sm:$0xff] %vm180, %v1064
      %1098 = vst.msk [vmem:[%s1086 + $0x58] sm:$0xff] %vm180, %v1065
      %1099 = vst.msk [vmem:[%s1086 + $0x60] sm:$0xff] %vm180, %v1066
      %1100 = vst.msk [vmem:[%s1086 + $0x68] sm:$0xff] %vm180, %v1067
      %1101 = vst.msk [vmem:[%s1086 + $0x70] sm:$0xff] %vm180, %v1068
      %1102 = vst.msk [vmem:[%s1086 + $0x78] sm:$0xff] %vm180, %v1069
      %1103 = vst.msk [vmem:[%s1086 + $0x80] sm:$0xff] %vm180, %v1070
      %1104 = vst.msk [vmem:[%s1086 + $0x88] sm:$0xff] %vm180, %v1071
      %1105 = vst.msk [vmem:[%s1086 + $0x90] sm:$0xff] %vm180, %v1072
      %1106 = vst.msk [vmem:[%s1086 + $0x98] sm:$0xff] %vm180, %v1073
      %1107 = vst.msk [vmem:[%s1086 + $0xa0] sm:$0xff] %vm180, %v1074
      %1108 = vst.msk [vmem:[%s1086 + $0xa8] sm:$0xff] %vm180, %v1075
      %1109 = vst.msk [vmem:[%s1086 + $0xb0] sm:$0xff] %vm180, %v1076
      %1110 = vst.msk [vmem:[%s1086 + $0xb8] sm:$0xff] %vm180, %v1077
      %1111 = vst.msk [vmem:[%s1086 + $0xc0] sm:$0xff] %vm180, %v1078
      %1112 = vst.msk [vmem:[%s1086 + $0xc8] sm:$0xff] %vm180, %v1079
      %1113 = vst.msk [vmem:[%s1086 + $0xd0] sm:$0xff] %vm180, %v1080
      %1114 = vst.msk [vmem:[%s1086 + $0xd8] sm:$0xff] %vm180, %v1081
      %1115 = vst.msk [vmem:[%s1086 + $0xe0] sm:$0xff] %vm180, %v1082
      %1116 = vst.msk [vmem:[%s1086 + $0xe8] sm:$0xff] %vm180, %v1083
      %1117 = vst.msk [vmem:[%s1086 + $0xf0] sm:$0xff] %vm180, %v1084
      %1118 = vst.msk [vmem:[%s1086 + $0xf8] sm:$0xff] %vm180, %v1085
      %v1147 = vrot.slane %v307, 4
      %v1148 = vrot.slane %v308, 4
      %v1149 = vsel %vm925, %v1147, %v1148
      %v1150 = vrot.slane %v329, 4
      %v1151 = vrot.slane %v330, 4
      %v1152 = vsel %vm925, %v1150, %v1151
      %v1153 = vrot.slane %v331, 4
      %v1154 = vrot.slane %v332, 4
      %v1155 = vsel %vm925, %v1153, %v1154
      %v1156 = vrot.slane %v333, 4
      %v1157 = vrot.slane %v334, 4
      %v1158 = vsel %vm925, %v1156, %v1157
      %v1159 = vrot.slane %v335, 4
      %v1160 = vrot.slane %v336, 4
      %v1161 = vsel %vm925, %v1159, %v1160
      %v1162 = vrot.slane %v337, 4
      %v1163 = vrot.slane %v338, 4
      %v1164 = vsel %vm925, %v1162, %v1163
      %v1165 = vrot.slane %v339, 4
      %v1166 = vrot.slane %v340, 4
      %v1167 = vsel %vm925, %v1165, %v1166
      %v1168 = vrot.slane %v341, 4
      %v1169 = vrot.slane %v342, 4
      %v1170 = vsel %vm925, %v1168, %v1169
      %v1171 = vrot.slane %v343, 4
      %v1172 = vrot.slane %v344, 4
      %v1173 = vsel %vm925, %v1171, %v1172
      %v1174 = vrot.slane %v345, 4
      %v1175 = vrot.slane %v346, 4
      %v1176 = vsel %vm925, %v1174, %v1175
      %v1177 = vrot.slane %v347, 4
      %v1178 = vrot.slane %v348, 4
      %v1179 = vsel %vm925, %v1177, %v1178
      %v1180 = vrot.slane %v349, 4
      %v1181 = vrot.slane %v350, 4
      %v1182 = vsel %vm925, %v1180, %v1181
      %v1183 = vrot.slane %v295, 4
      %v1184 = vrot.slane %v296, 4
      %v1185 = vsel %vm925, %v1183, %v1184
      %v1186 = vrot.slane %v297, 4
      %v1187 = vrot.slane %v298, 4
      %v1188 = vsel %vm925, %v1186, %v1187
      %v1189 = vrot.slane %v299, 4
      %v1190 = vrot.slane %v300, 4
      %v1191 = vsel %vm925, %v1189, %v1190
      %v1192 = vrot.slane %v301, 4
      %v1193 = vrot.slane %v302, 4
      %v1194 = vsel %vm925, %v1192, %v1193
      %v1243 = vsel %vm925, -inf, %v1147
      %v1244 = vsel %vm925, -inf, %v1150
      %v1245 = vsel %vm925, -inf, %v1153
      %v1246 = vsel %vm925, -inf, %v1156
      %v1247 = vsel %vm925, -inf, %v1159
      %v1248 = vsel %vm925, -inf, %v1162
      %v1249 = vsel %vm925, -inf, %v1165
      %v1250 = vsel %vm925, -inf, %v1168
      %v1251 = vsel %vm925, -inf, %v1171
      %v1252 = vsel %vm925, -inf, %v1174
      %v1253 = vsel %vm925, -inf, %v1177
      %v1254 = vsel %vm925, -inf, %v1180
      %v1255 = vsel %vm925, -inf, %v1183
      %v1256 = vsel %vm925, -inf, %v1186
      %v1257 = vsel %vm925, -inf, %v1189
      %v1258 = vsel %vm925, -inf, %v1192
      %v1275 = vrot.slane %v1243, 1
      %v1276 = vrot.slane %v1149, 1
      %v1277 = vsel %vm538, %v1275, %v1276
      %v1278 = vrot.slane %v1148, 1
      %v1279 = vsel %vm538, %v1276, %v1278
      %v1280 = vrot.slane %v1244, 1
      %v1281 = vrot.slane %v1152, 1
      %v1282 = vsel %vm538, %v1280, %v1281
      %v1283 = vrot.slane %v1151, 1
      %v1284 = vsel %vm538, %v1281, %v1283
      %v1285 = vrot.slane %v1245, 1
      %v1286 = vrot.slane %v1155, 1
      %v1287 = vsel %vm538, %v1285, %v1286
      %v1288 = vrot.slane %v1154, 1
      %v1289 = vsel %vm538, %v1286, %v1288
      %v1290 = vrot.slane %v1246, 1
      %v1291 = vrot.slane %v1158, 1
      %v1292 = vsel %vm538, %v1290, %v1291
      %v1293 = vrot.slane %v1157, 1
      %v1294 = vsel %vm538, %v1291, %v1293
      %v1295 = vrot.slane %v1247, 1
      %v1296 = vrot.slane %v1161, 1
      %v1297 = vsel %vm538, %v1295, %v1296
      %v1298 = vrot.slane %v1160, 1
      %v1299 = vsel %vm538, %v1296, %v1298
      %v1300 = vrot.slane %v1248, 1
      %v1301 = vrot.slane %v1164, 1
      %v1302 = vsel %vm538, %v1300, %v1301
      %v1303 = vrot.slane %v1163, 1
      %v1304 = vsel %vm538, %v1301, %v1303
      %v1305 = vrot.slane %v1249, 1
      %v1306 = vrot.slane %v1167, 1
      %v1307 = vsel %vm538, %v1305, %v1306
      %v1308 = vrot.slane %v1166, 1
      %v1309 = vsel %vm538, %v1306, %v1308
      %v1310 = vrot.slane %v1250, 1
      %v1311 = vrot.slane %v1170, 1
      %v1312 = vsel %vm538, %v1310, %v1311
      %v1313 = vrot.slane %v1169, 1
      %v1314 = vsel %vm538, %v1311, %v1313
      %v1315 = vrot.slane %v1251, 1
      %v1316 = vrot.slane %v1173, 1
      %v1317 = vsel %vm538, %v1315, %v1316
      %v1318 = vrot.slane %v1172, 1
      %v1319 = vsel %vm538, %v1316, %v1318
      %v1320 = vrot.slane %v1252, 1
      %v1321 = vrot.slane %v1176, 1
      %v1322 = vsel %vm538, %v1320, %v1321
      %v1323 = vrot.slane %v1175, 1
      %v1324 = vsel %vm538, %v1321, %v1323
      %v1325 = vrot.slane %v1253, 1
      %v1326 = vrot.slane %v1179, 1
      %v1327 = vsel %vm538, %v1325, %v1326
      %v1328 = vrot.slane %v1178, 1
      %v1329 = vsel %vm538, %v1326, %v1328
      %v1330 = vrot.slane %v1254, 1
      %v1331 = vrot.slane %v1182, 1
      %v1332 = vsel %vm538, %v1330, %v1331
      %v1333 = vrot.slane %v1181, 1
      %v1334 = vsel %vm538, %v1331, %v1333
      %v1335 = vrot.slane %v1255, 1
      %v1336 = vrot.slane %v1185, 1
      %v1337 = vsel %vm538, %v1335, %v1336
      %v1338 = vrot.slane %v1184, 1
      %v1339 = vsel %vm538, %v1336, %v1338
      %v1340 = vrot.slane %v1256, 1
      %v1341 = vrot.slane %v1188, 1
      %v1342 = vsel %vm538, %v1340, %v1341
      %v1343 = vrot.slane %v1187, 1
      %v1344 = vsel %vm538, %v1341, %v1343
      %v1345 = vrot.slane %v1257, 1
      %v1346 = vrot.slane %v1191, 1
      %v1347 = vsel %vm538, %v1345, %v1346
      %v1348 = vrot.slane %v1190, 1
      %v1349 = vsel %vm538, %v1346, %v1348
      %v1350 = vrot.slane %v1258, 1
      %v1351 = vrot.slane %v1194, 1
      %v1352 = vsel %vm538, %v1350, %v1351
      %v1353 = vrot.slane %v1193, 1
      %v1354 = vsel %vm538, %v1351, %v1353
      %vm1403 = vcmask 1042432
      %v1404 = vsel %vm1403, %v1278, -inf
      %v1405 = vsel %vm1403, %v1283, -inf
      %v1406 = vsel %vm1403, %v1288, -inf
      %v1407 = vsel %vm1403, %v1293, -inf
      %v1408 = vsel %vm1403, %v1298, -inf
      %v1409 = vsel %vm1403, %v1303, -inf
      %v1410 = vsel %vm1403, %v1308, -inf
      %v1411 = vsel %vm1403, %v1313, -inf
      %v1412 = vsel %vm1403, %v1318, -inf
      %v1413 = vsel %vm1403, %v1323, -inf
      %v1414 = vsel %vm1403, %v1328, -inf
      %v1415 = vsel %vm1403, %v1333, -inf
      %v1416 = vsel %vm1403, %v1338, -inf
      %v1417 = vsel %vm1403, %v1343, -inf
      %v1418 = vsel %vm1403, %v1348, -inf
      %v1419 = vsel %vm1403, %v1353, -inf
      %v1420 = vmax.f32 %v1243, %v1277
      %v1421 = vmax.f32 %v1149, %v1279
      %v1422 = vmax.f32 %v1148, %v1404
      %v1423 = vmax.f32 %v1244, %v1282
      %v1424 = vmax.f32 %v1152, %v1284
      %v1425 = vmax.f32 %v1151, %v1405
      %v1426 = vmax.f32 %v1245, %v1287
      %v1427 = vmax.f32 %v1155, %v1289
      %v1428 = vmax.f32 %v1154, %v1406
      %v1429 = vmax.f32 %v1246, %v1292
      %v1430 = vmax.f32 %v1158, %v1294
      %v1431 = vmax.f32 %v1157, %v1407
      %v1432 = vmax.f32 %v1247, %v1297
      %v1433 = vmax.f32 %v1161, %v1299
      %v1434 = vmax.f32 %v1160, %v1408
      %v1435 = vmax.f32 %v1248, %v1302
      %v1436 = vmax.f32 %v1164, %v1304
      %v1437 = vmax.f32 %v1163, %v1409
      %v1438 = vmax.f32 %v1249, %v1307
      %v1439 = vmax.f32 %v1167, %v1309
      %v1440 = vmax.f32 %v1166, %v1410
      %v1441 = vmax.f32 %v1250, %v1312
      %v1442 = vmax.f32 %v1170, %v1314
      %v1443 = vmax.f32 %v1169, %v1411
      %v1444 = vmax.f32 %v1251, %v1317
      %v1445 = vmax.f32 %v1173, %v1319
      %v1446 = vmax.f32 %v1172, %v1412
      %v1447 = vmax.f32 %v1252, %v1322
      %v1448 = vmax.f32 %v1176, %v1324
      %v1449 = vmax.f32 %v1175, %v1413
      %v1450 = vmax.f32 %v1253, %v1327
      %v1451 = vmax.f32 %v1179, %v1329
      %v1452 = vmax.f32 %v1178, %v1414
      %v1453 = vmax.f32 %v1254, %v1332
      %v1454 = vmax.f32 %v1182, %v1334
      %v1455 = vmax.f32 %v1181, %v1415
      %v1456 = vmax.f32 %v1255, %v1337
      %v1457 = vmax.f32 %v1185, %v1339
      %v1458 = vmax.f32 %v1184, %v1416
      %v1459 = vmax.f32 %v1256, %v1342
      %v1460 = vmax.f32 %v1188, %v1344
      %v1461 = vmax.f32 %v1187, %v1417
      %v1462 = vmax.f32 %v1257, %v1347
      %v1463 = vmax.f32 %v1191, %v1349
      %v1464 = vmax.f32 %v1190, %v1418
      %v1465 = vmax.f32 %v1258, %v1352
      %v1466 = vmax.f32 %v1194, %v1354
      %v1467 = vmax.f32 %v1193, %v1419
      %v1516 = vrot.slane %v1420, 2
      %v1517 = vrot.slane %v1421, 2
      %v1518 = vsel %vm780, %v1516, %v1517
      %v1519 = vrot.slane %v1422, 2
      %v1520 = vsel %vm780, %v1517, %v1519
      %v1521 = vrot.slane %v1423, 2
      %v1522 = vrot.slane %v1424, 2
      %v1523 = vsel %vm780, %v1521, %v1522
      %v1524 = vrot.slane %v1425, 2
      %v1525 = vsel %vm780, %v1522, %v1524
      %v1526 = vrot.slane %v1426, 2
      %v1527 = vrot.slane %v1427, 2
      %v1528 = vsel %vm780, %v1526, %v1527
      %v1529 = vrot.slane %v1428, 2
      %v1530 = vsel %vm780, %v1527, %v1529
      %v1531 = vrot.slane %v1429, 2
      %v1532 = vrot.slane %v1430, 2
      %v1533 = vsel %vm780, %v1531, %v1532
      %v1534 = vrot.slane %v1431, 2
      %v1535 = vsel %vm780, %v1532, %v1534
      %v1536 = vrot.slane %v1432, 2
      %v1537 = vrot.slane %v1433, 2
      %v1538 = vsel %vm780, %v1536, %v1537
      %v1539 = vrot.slane %v1434, 2
      %v1540 = vsel %vm780, %v1537, %v1539
      %v1541 = vrot.slane %v1435, 2
      %v1542 = vrot.slane %v1436, 2
      %v1543 = vsel %vm780, %v1541, %v1542
      %v1544 = vrot.slane %v1437, 2
      %v1545 = vsel %vm780, %v1542, %v1544
      %v1546 = vrot.slane %v1438, 2
      %v1547 = vrot.slane %v1439, 2
      %v1548 = vsel %vm780, %v1546, %v1547
      %v1549 = vrot.slane %v1440, 2
      %v1550 = vsel %vm780, %v1547, %v1549
      %v1551 = vrot.slane %v1441, 2
      %v1552 = vrot.slane %v1442, 2
      %v1553 = vsel %vm780, %v1551, %v1552
      %v1554 = vrot.slane %v1443, 2
      %v1555 = vsel %vm780, %v1552, %v1554
      %v1556 = vrot.slane %v1444, 2
      %v1557 = vrot.slane %v1445, 2
      %v1558 = vsel %vm780, %v1556, %v1557
      %v1559 = vrot.slane %v1446, 2
      %v1560 = vsel %vm780, %v1557, %v1559
      %v1561 = vrot.slane %v1447, 2
      %v1562 = vrot.slane %v1448, 2
      %v1563 = vsel %vm780, %v1561, %v1562
      %v1564 = vrot.slane %v1449, 2
      %v1565 = vsel %vm780, %v1562, %v1564
      %v1566 = vrot.slane %v1450, 2
      %v1567 = vrot.slane %v1451, 2
      %v1568 = vsel %vm780, %v1566, %v1567
      %v1569 = vrot.slane %v1452, 2
      %v1570 = vsel %vm780, %v1567, %v1569
      %v1571 = vrot.slane %v1453, 2
      %v1572 = vrot.slane %v1454, 2
      %v1573 = vsel %vm780, %v1571, %v1572
      %v1574 = vrot.slane %v1455, 2
      %v1575 = vsel %vm780, %v1572, %v1574
      %v1576 = vrot.slane %v1456, 2
      %v1577 = vrot.slane %v1457, 2
      %v1578 = vsel %vm780, %v1576, %v1577
      %v1579 = vrot.slane %v1458, 2
      %v1580 = vsel %vm780, %v1577, %v1579
      %v1581 = vrot.slane %v1459, 2
      %v1582 = vrot.slane %v1460, 2
      %v1583 = vsel %vm780, %v1581, %v1582
      %v1584 = vrot.slane %v1461, 2
      %v1585 = vsel %vm780, %v1582, %v1584
      %v1586 = vrot.slane %v1462, 2
      %v1587 = vrot.slane %v1463, 2
      %v1588 = vsel %vm780, %v1586, %v1587
      %v1589 = vrot.slane %v1464, 2
      %v1590 = vsel %vm780, %v1587, %v1589
      %v1591 = vrot.slane %v1465, 2
      %v1592 = vrot.slane %v1466, 2
      %v1593 = vsel %vm780, %v1591, %v1592
      %v1594 = vrot.slane %v1467, 2
      %v1595 = vsel %vm780, %v1592, %v1594
      %v1644 = vsel %vm409, %v1519, -inf
      %v1645 = vsel %vm409, %v1524, -inf
      %v1646 = vsel %vm409, %v1529, -inf
      %v1647 = vsel %vm409, %v1534, -inf
      %v1648 = vsel %vm409, %v1539, -inf
      %v1649 = vsel %vm409, %v1544, -inf
      %v1650 = vsel %vm409, %v1549, -inf
      %v1651 = vsel %vm409, %v1554, -inf
      %v1652 = vsel %vm409, %v1559, -inf
      %v1653 = vsel %vm409, %v1564, -inf
      %v1654 = vsel %vm409, %v1569, -inf
      %v1655 = vsel %vm409, %v1574, -inf
      %v1656 = vsel %vm409, %v1579, -inf
      %v1657 = vsel %vm409, %v1584, -inf
      %v1658 = vsel %vm409, %v1589, -inf
      %v1659 = vsel %vm409, %v1594, -inf
      %v1660 = vmax.f32 %v1420, %v1518
      %v1661 = vmax.f32 %v1421, %v1520
      %v1662 = vmax.f32 %v1422, %v1644
      %v1663 = vmax.f32 %v1423, %v1523
      %v1664 = vmax.f32 %v1424, %v1525
      %v1665 = vmax.f32 %v1425, %v1645
      %v1666 = vmax.f32 %v1426, %v1528
      %v1667 = vmax.f32 %v1427, %v1530
      %v1668 = vmax.f32 %v1428, %v1646
      %v1669 = vmax.f32 %v1429, %v1533
      %v1670 = vmax.f32 %v1430, %v1535
      %v1671 = vmax.f32 %v1431, %v1647
      %v1672 = vmax.f32 %v1432, %v1538
      %v1673 = vmax.f32 %v1433, %v1540
      %v1674 = vmax.f32 %v1434, %v1648
      %v1675 = vmax.f32 %v1435, %v1543
      %v1676 = vmax.f32 %v1436, %v1545
      %v1677 = vmax.f32 %v1437, %v1649
      %v1678 = vmax.f32 %v1438, %v1548
      %v1679 = vmax.f32 %v1439, %v1550
      %v1680 = vmax.f32 %v1440, %v1650
      %v1681 = vmax.f32 %v1441, %v1553
      %v1682 = vmax.f32 %v1442, %v1555
      %v1683 = vmax.f32 %v1443, %v1651
      %v1684 = vmax.f32 %v1444, %v1558
      %v1685 = vmax.f32 %v1445, %v1560
      %v1686 = vmax.f32 %v1446, %v1652
      %v1687 = vmax.f32 %v1447, %v1563
      %v1688 = vmax.f32 %v1448, %v1565
      %v1689 = vmax.f32 %v1449, %v1653
      %v1690 = vmax.f32 %v1450, %v1568
      %v1691 = vmax.f32 %v1451, %v1570
      %v1692 = vmax.f32 %v1452, %v1654
      %v1693 = vmax.f32 %v1453, %v1573
      %v1694 = vmax.f32 %v1454, %v1575
      %v1695 = vmax.f32 %v1455, %v1655
      %v1696 = vmax.f32 %v1456, %v1578
      %v1697 = vmax.f32 %v1457, %v1580
      %v1698 = vmax.f32 %v1458, %v1656
      %v1699 = vmax.f32 %v1459, %v1583
      %v1700 = vmax.f32 %v1460, %v1585
      %v1701 = vmax.f32 %v1461, %v1657
      %v1702 = vmax.f32 %v1462, %v1588
      %v1703 = vmax.f32 %v1463, %v1590
      %v1704 = vmax.f32 %v1464, %v1658
      %v1705 = vmax.f32 %v1465, %v1593
      %v1706 = vmax.f32 %v1466, %v1595
      %v1707 = vmax.f32 %v1467, %v1659
      %v1756 = vrot.slane %v1660, 4
      %v1757 = vrot.slane %v1661, 4
      %v1758 = vsel %vm925, %v1756, %v1757
      %v1759 = vrot.slane %v1662, 4
      %v1760 = vsel %vm925, %v1757, %v1759
      %v1761 = vrot.slane %v1663, 4
      %v1762 = vrot.slane %v1664, 4
      %v1763 = vsel %vm925, %v1761, %v1762
      %v1764 = vrot.slane %v1665, 4
      %v1765 = vsel %vm925, %v1762, %v1764
      %v1766 = vrot.slane %v1666, 4
      %v1767 = vrot.slane %v1667, 4
      %v1768 = vsel %vm925, %v1766, %v1767
      %v1769 = vrot.slane %v1668, 4
      %v1770 = vsel %vm925, %v1767, %v1769
      %v1771 = vrot.slane %v1669, 4
      %v1772 = vrot.slane %v1670, 4
      %v1773 = vsel %vm925, %v1771, %v1772
      %v1774 = vrot.slane %v1671, 4
      %v1775 = vsel %vm925, %v1772, %v1774
      %v1776 = vrot.slane %v1672, 4
      %v1777 = vrot.slane %v1673, 4
      %v1778 = vsel %vm925, %v1776, %v1777
      %v1779 = vrot.slane %v1674, 4
      %v1780 = vsel %vm925, %v1777, %v1779
      %v1781 = vrot.slane %v1675, 4
      %v1782 = vrot.slane %v1676, 4
      %v1783 = vsel %vm925, %v1781, %v1782
      %v1784 = vrot.slane %v1677, 4
      %v1785 = vsel %vm925, %v1782, %v1784
      %v1786 = vrot.slane %v1678, 4
      %v1787 = vrot.slane %v1679, 4
      %v1788 = vsel %vm925, %v1786, %v1787
      %v1789 = vrot.slane %v1680, 4
      %v1790 = vsel %vm925, %v1787, %v1789
      %v1791 = vrot.slane %v1681, 4
      %v1792 = vrot.slane %v1682, 4
      %v1793 = vsel %vm925, %v1791, %v1792
      %v1794 = vrot.slane %v1683, 4
      %v1795 = vsel %vm925, %v1792, %v1794
      %v1796 = vrot.slane %v1684, 4
      %v1797 = vrot.slane %v1685, 4
      %v1798 = vsel %vm925, %v1796, %v1797
      %v1799 = vrot.slane %v1686, 4
      %v1800 = vsel %vm925, %v1797, %v1799
      %v1801 = vrot.slane %v1687, 4
      %v1802 = vrot.slane %v1688, 4
      %v1803 = vsel %vm925, %v1801, %v1802
      %v1804 = vrot.slane %v1689, 4
      %v1805 = vsel %vm925, %v1802, %v1804
      %v1806 = vrot.slane %v1690, 4
      %v1807 = vrot.slane %v1691, 4
      %v1808 = vsel %vm925, %v1806, %v1807
      %v1809 = vrot.slane %v1692, 4
      %v1810 = vsel %vm925, %v1807, %v1809
      %v1811 = vrot.slane %v1693, 4
      %v1812 = vrot.slane %v1694, 4
      %v1813 = vsel %vm925, %v1811, %v1812
      %v1814 = vrot.slane %v1695, 4
      %v1815 = vsel %vm925, %v1812, %v1814
      %v1816 = vrot.slane %v1696, 4
      %v1817 = vrot.slane %v1697, 4
      %v1818 = vsel %vm925, %v1816, %v1817
      %v1819 = vrot.slane %v1698, 4
      %v1820 = vsel %vm925, %v1817, %v1819
      %v1821 = vrot.slane %v1699, 4
      %v1822 = vrot.slane %v1700, 4
      %v1823 = vsel %vm925, %v1821, %v1822
      %v1824 = vrot.slane %v1701, 4
      %v1825 = vsel %vm925, %v1822, %v1824
      %v1826 = vrot.slane %v1702, 4
      %v1827 = vrot.slane %v1703, 4
      %v1828 = vsel %vm925, %v1826, %v1827
      %v1829 = vrot.slane %v1704, 4
      %v1830 = vsel %vm925, %v1827, %v1829
      %v1831 = vrot.slane %v1705, 4
      %v1832 = vrot.slane %v1706, 4
      %v1833 = vsel %vm925, %v1831, %v1832
      %v1834 = vrot.slane %v1707, 4
      %v1835 = vsel %vm925, %v1832, %v1834
      %v1868 = vmax.f32 %v1660, %v1758
      %v1869 = vmax.f32 %v1661, %v1760
      %v1870 = vmax.f32 %v1663, %v1763
      %v1871 = vmax.f32 %v1664, %v1765
      %v1872 = vmax.f32 %v1666, %v1768
      %v1873 = vmax.f32 %v1667, %v1770
      %v1874 = vmax.f32 %v1669, %v1773
      %v1875 = vmax.f32 %v1670, %v1775
      %v1876 = vmax.f32 %v1672, %v1778
      %v1877 = vmax.f32 %v1673, %v1780
      %v1878 = vmax.f32 %v1675, %v1783
      %v1879 = vmax.f32 %v1676, %v1785
      %v1880 = vmax.f32 %v1678, %v1788
      %v1881 = vmax.f32 %v1679, %v1790
      %v1882 = vmax.f32 %v1681, %v1793
      %v1883 = vmax.f32 %v1682, %v1795
      %v1884 = vmax.f32 %v1684, %v1798
      %v1885 = vmax.f32 %v1685, %v1800
      %v1886 = vmax.f32 %v1687, %v1803
      %v1887 = vmax.f32 %v1688, %v1805
      %v1888 = vmax.f32 %v1690, %v1808
      %v1889 = vmax.f32 %v1691, %v1810
      %v1890 = vmax.f32 %v1693, %v1813
      %v1891 = vmax.f32 %v1694, %v1815
      %v1892 = vmax.f32 %v1696, %v1818
      %v1893 = vmax.f32 %v1697, %v1820
      %v1894 = vmax.f32 %v1699, %v1823
      %v1895 = vmax.f32 %v1700, %v1825
      %v1896 = vmax.f32 %v1702, %v1828
      %v1897 = vmax.f32 %v1703, %v1830
      %v1898 = vmax.f32 %v1705, %v1833
      %v1899 = vmax.f32 %v1706, %v1835
      %v1900 = vsel %vm925, %v1148, -inf
      %v1901 = vsel %vm925, %v1151, -inf
      %v1902 = vsel %vm925, %v1154, -inf
      %v1903 = vsel %vm925, %v1157, -inf
      %v1904 = vsel %vm925, %v1160, -inf
      %v1905 = vsel %vm925, %v1163, -inf
      %v1906 = vsel %vm925, %v1166, -inf
      %v1907 = vsel %vm925, %v1169, -inf
      %v1908 = vsel %vm925, %v1172, -inf
      %v1909 = vsel %vm925, %v1175, -inf
      %v1910 = vsel %vm925, %v1178, -inf
      %v1911 = vsel %vm925, %v1181, -inf
      %v1912 = vsel %vm925, %v1184, -inf
      %v1913 = vsel %vm925, %v1187, -inf
      %v1914 = vsel %vm925, %v1190, -inf
      %v1915 = vsel %vm925, %v1193, -inf
      %v1916 = vmax.f32 %v1868, %v1149
      %v1917 = vmax.f32 %v1869, %v1900
      %v1918 = vmax.f32 %v1870, %v1152
      %v1919 = vmax.f32 %v1871, %v1901
      %v1920 = vmax.f32 %v1872, %v1155
      %v1921 = vmax.f32 %v1873, %v1902
      %v1922 = vmax.f32 %v1874, %v1158
      %v1923 = vmax.f32 %v1875, %v1903
      %v1924 = vmax.f32 %v1876, %v1161
      %v1925 = vmax.f32 %v1877, %v1904
      %v1926 = vmax.f32 %v1878, %v1164
      %v1927 = vmax.f32 %v1879, %v1905
      %v1928 = vmax.f32 %v1880, %v1167
      %v1929 = vmax.f32 %v1881, %v1906
      %v1930 = vmax.f32 %v1882, %v1170
      %v1931 = vmax.f32 %v1883, %v1907
      %v1932 = vmax.f32 %v1884, %v1173
      %v1933 = vmax.f32 %v1885, %v1908
      %v1934 = vmax.f32 %v1886, %v1176
      %v1935 = vmax.f32 %v1887, %v1909
      %v1936 = vmax.f32 %v1888, %v1179
      %v1937 = vmax.f32 %v1889, %v1910
      %v1938 = vmax.f32 %v1890, %v1182
      %v1939 = vmax.f32 %v1891, %v1911
      %v1940 = vmax.f32 %v1892, %v1185
      %v1941 = vmax.f32 %v1893, %v1912
      %v1942 = vmax.f32 %v1894, %v1188
      %v1943 = vmax.f32 %v1895, %v1913
      %v1944 = vmax.f32 %v1896, %v1191
      %v1945 = vmax.f32 %v1897, %v1914
      %v1946 = vmax.f32 %v1898, %v1194
      %v1947 = vmax.f32 %v1899, %v1915
      %s1948 = scalar_lea.vmem %s147, 512
      %1949 = vst.msk [vmem:[%s1948] sm:$0xff] %vm180, %v1916
      %1950 = vst.msk [vmem:[%s1948 + $0x8] sm:$0xff] %vm180, %v1917
      %1951 = vst.msk [vmem:[%s1948 + $0x10] sm:$0xff] %vm180, %v1918
      %1952 = vst.msk [vmem:[%s1948 + $0x18] sm:$0xff] %vm180, %v1919
      %1953 = vst.msk [vmem:[%s1948 + $0x20] sm:$0xff] %vm180, %v1920
      %1954 = vst.msk [vmem:[%s1948 + $0x28] sm:$0xff] %vm180, %v1921
      %1955 = vst.msk [vmem:[%s1948 + $0x30] sm:$0xff] %vm180, %v1922
      %1956 = vst.msk [vmem:[%s1948 + $0x38] sm:$0xff] %vm180, %v1923
      %1957 = vst.msk [vmem:[%s1948 + $0x40] sm:$0xff] %vm180, %v1924
      %1958 = vst.msk [vmem:[%s1948 + $0x48] sm:$0xff] %vm180, %v1925
      %1959 = vst.msk [vmem:[%s1948 + $0x50] sm:$0xff] %vm180, %v1926
      %1960 = vst.msk [vmem:[%s1948 + $0x58] sm:$0xff] %vm180, %v1927
      %1961 = vst.msk [vmem:[%s1948 + $0x60] sm:$0xff] %vm180, %v1928
      %1962 = vst.msk [vmem:[%s1948 + $0x68] sm:$0xff] %vm180, %v1929
      %1963 = vst.msk [vmem:[%s1948 + $0x70] sm:$0xff] %vm180, %v1930
      %1964 = vst.msk [vmem:[%s1948 + $0x78] sm:$0xff] %vm180, %v1931
      %1965 = vst.msk [vmem:[%s1948 + $0x80] sm:$0xff] %vm180, %v1932
      %1966 = vst.msk [vmem:[%s1948 + $0x88] sm:$0xff] %vm180, %v1933
      %1967 = vst.msk [vmem:[%s1948 + $0x90] sm:$0xff] %vm180, %v1934
      %1968 = vst.msk [vmem:[%s1948 + $0x98] sm:$0xff] %vm180, %v1935
      %1969 = vst.msk [vmem:[%s1948 + $0xa0] sm:$0xff] %vm180, %v1936
      %1970 = vst.msk [vmem:[%s1948 + $0xa8] sm:$0xff] %vm180, %v1937
      %1971 = vst.msk [vmem:[%s1948 + $0xb0] sm:$0xff] %vm180, %v1938
      %1972 = vst.msk [vmem:[%s1948 + $0xb8] sm:$0xff] %vm180, %v1939
      %1973 = vst.msk [vmem:[%s1948 + $0xc0] sm:$0xff] %vm180, %v1940
      %1974 = vst.msk [vmem:[%s1948 + $0xc8] sm:$0xff] %vm180, %v1941
      %1975 = vst.msk [vmem:[%s1948 + $0xd0] sm:$0xff] %vm180, %v1942
      %1976 = vst.msk [vmem:[%s1948 + $0xd8] sm:$0xff] %vm180, %v1943
      %1977 = vst.msk [vmem:[%s1948 + $0xe0] sm:$0xff] %vm180, %v1944
      %1978 = vst.msk [vmem:[%s1948 + $0xe8] sm:$0xff] %vm180, %v1945
      %1979 = vst.msk [vmem:[%s1948 + $0xf0] sm:$0xff] %vm180, %v1946
      %1980 = vst.msk [vmem:[%s1948 + $0xf8] sm:$0xff] %vm180, %v1947
      %v2007 = vrot.slane %v351, 2
      %v2008 = vrot.slane %v352, 2
      %v2009 = vsel %vm780, %v2007, %v2008
      %v2010 = vrot.slane %v353, 2
      %v2011 = vrot.slane %v354, 2
      %v2012 = vsel %vm780, %v2010, %v2011
      %v2013 = vrot.slane %v355, 2
      %v2014 = vrot.slane %v356, 2
      %v2015 = vsel %vm780, %v2013, %v2014
      %v2016 = vrot.slane %v357, 2
      %v2017 = vrot.slane %v358, 2
      %v2018 = vsel %vm780, %v2016, %v2017
      %v2019 = vrot.slane %v359, 2
      %v2020 = vrot.slane %v360, 2
      %v2021 = vsel %vm780, %v2019, %v2020
      %v2022 = vrot.slane %v361, 2
      %v2023 = vrot.slane %v362, 2
      %v2024 = vsel %vm780, %v2022, %v2023
      %v2025 = vrot.slane %v363, 2
      %v2026 = vrot.slane %v364, 2
      %v2027 = vsel %vm780, %v2025, %v2026
      %v2028 = vrot.slane %v365, 2
      %v2029 = vrot.slane %v366, 2
      %v2030 = vsel %vm780, %v2028, %v2029
      %v2031 = vrot.slane %v367, 2
      %v2032 = vrot.slane %v368, 2
      %v2033 = vsel %vm780, %v2031, %v2032
      %v2034 = vrot.slane %v369, 2
      %v2035 = vrot.slane %v370, 2
      %v2036 = vsel %vm780, %v2034, %v2035
      %v2037 = vrot.slane %v371, 2
      %v2038 = vrot.slane %v372, 2
      %v2039 = vsel %vm780, %v2037, %v2038
      %v2040 = vrot.slane %v373, 2
      %v2041 = vrot.slane %v374, 2
      %v2042 = vsel %vm780, %v2040, %v2041
      %v2043 = vrot.slane %v375, 2
      %v2044 = vrot.slane %v376, 2
      %v2045 = vsel %vm780, %v2043, %v2044
      %v2046 = vrot.slane %v349, 2
      %v2047 = vrot.slane %v350, 2
      %v2048 = vsel %vm780, %v2046, %v2047
      %v2049 = vrot.slane %v295, 2
      %v2050 = vrot.slane %v296, 2
      %v2051 = vsel %vm780, %v2049, %v2050
      %v2052 = vrot.slane %v297, 2
      %v2053 = vrot.slane %v298, 2
      %v2054 = vsel %vm780, %v2052, %v2053
      %v2103 = vsel %vm780, -inf, %v2007
      %v2104 = vsel %vm780, -inf, %v2010
      %v2105 = vsel %vm780, -inf, %v2013
      %v2106 = vsel %vm780, -inf, %v2016
      %v2107 = vsel %vm780, -inf, %v2019
      %v2108 = vsel %vm780, -inf, %v2022
      %v2109 = vsel %vm780, -inf, %v2025
      %v2110 = vsel %vm780, -inf, %v2028
      %v2111 = vsel %vm780, -inf, %v2031
      %v2112 = vsel %vm780, -inf, %v2034
      %v2113 = vsel %vm780, -inf, %v2037
      %v2114 = vsel %vm780, -inf, %v2040
      %v2115 = vsel %vm780, -inf, %v2043
      %v2116 = vsel %vm780, -inf, %v2046
      %v2117 = vsel %vm780, -inf, %v2049
      %v2118 = vsel %vm780, -inf, %v2052
      %v2135 = vrot.slane %v2103, 1
      %v2136 = vrot.slane %v2009, 1
      %v2137 = vsel %vm538, %v2135, %v2136
      %v2138 = vrot.slane %v2008, 1
      %v2139 = vsel %vm538, %v2136, %v2138
      %v2140 = vrot.slane %v2104, 1
      %v2141 = vrot.slane %v2012, 1
      %v2142 = vsel %vm538, %v2140, %v2141
      %v2143 = vrot.slane %v2011, 1
      %v2144 = vsel %vm538, %v2141, %v2143
      %v2145 = vrot.slane %v2105, 1
      %v2146 = vrot.slane %v2015, 1
      %v2147 = vsel %vm538, %v2145, %v2146
      %v2148 = vrot.slane %v2014, 1
      %v2149 = vsel %vm538, %v2146, %v2148
      %v2150 = vrot.slane %v2106, 1
      %v2151 = vrot.slane %v2018, 1
      %v2152 = vsel %vm538, %v2150, %v2151
      %v2153 = vrot.slane %v2017, 1
      %v2154 = vsel %vm538, %v2151, %v2153
      %v2155 = vrot.slane %v2107, 1
      %v2156 = vrot.slane %v2021, 1
      %v2157 = vsel %vm538, %v2155, %v2156
      %v2158 = vrot.slane %v2020, 1
      %v2159 = vsel %vm538, %v2156, %v2158
      %v2160 = vrot.slane %v2108, 1
      %v2161 = vrot.slane %v2024, 1
      %v2162 = vsel %vm538, %v2160, %v2161
      %v2163 = vrot.slane %v2023, 1
      %v2164 = vsel %vm538, %v2161, %v2163
      %v2165 = vrot.slane %v2109, 1
      %v2166 = vrot.slane %v2027, 1
      %v2167 = vsel %vm538, %v2165, %v2166
      %v2168 = vrot.slane %v2026, 1
      %v2169 = vsel %vm538, %v2166, %v2168
      %v2170 = vrot.slane %v2110, 1
      %v2171 = vrot.slane %v2030, 1
      %v2172 = vsel %vm538, %v2170, %v2171
      %v2173 = vrot.slane %v2029, 1
      %v2174 = vsel %vm538, %v2171, %v2173
      %v2175 = vrot.slane %v2111, 1
      %v2176 = vrot.slane %v2033, 1
      %v2177 = vsel %vm538, %v2175, %v2176
      %v2178 = vrot.slane %v2032, 1
      %v2179 = vsel %vm538, %v2176, %v2178
      %v2180 = vrot.slane %v2112, 1
      %v2181 = vrot.slane %v2036, 1
      %v2182 = vsel %vm538, %v2180, %v2181
      %v2183 = vrot.slane %v2035, 1
      %v2184 = vsel %vm538, %v2181, %v2183
      %v2185 = vrot.slane %v2113, 1
      %v2186 = vrot.slane %v2039, 1
      %v2187 = vsel %vm538, %v2185, %v2186
      %v2188 = vrot.slane %v2038, 1
      %v2189 = vsel %vm538, %v2186, %v2188
      %v2190 = vrot.slane %v2114, 1
      %v2191 = vrot.slane %v2042, 1
      %v2192 = vsel %vm538, %v2190, %v2191
      %v2193 = vrot.slane %v2041, 1
      %v2194 = vsel %vm538, %v2191, %v2193
      %v2195 = vrot.slane %v2115, 1
      %v2196 = vrot.slane %v2045, 1
      %v2197 = vsel %vm538, %v2195, %v2196
      %v2198 = vrot.slane %v2044, 1
      %v2199 = vsel %vm538, %v2196, %v2198
      %v2200 = vrot.slane %v2116, 1
      %v2201 = vrot.slane %v2048, 1
      %v2202 = vsel %vm538, %v2200, %v2201
      %v2203 = vrot.slane %v2047, 1
      %v2204 = vsel %vm538, %v2201, %v2203
      %v2205 = vrot.slane %v2117, 1
      %v2206 = vrot.slane %v2051, 1
      %v2207 = vsel %vm538, %v2205, %v2206
      %v2208 = vrot.slane %v2050, 1
      %v2209 = vsel %vm538, %v2206, %v2208
      %v2210 = vrot.slane %v2118, 1
      %v2211 = vrot.slane %v2054, 1
      %v2212 = vsel %vm538, %v2210, %v2211
      %v2213 = vrot.slane %v2053, 1
      %v2214 = vsel %vm538, %v2211, %v2213
      %vm2263 = vcmask 1044480
      %v2264 = vsel %vm2263, %v2138, -inf
      %v2265 = vsel %vm2263, %v2143, -inf
      %v2266 = vsel %vm2263, %v2148, -inf
      %v2267 = vsel %vm2263, %v2153, -inf
      %v2268 = vsel %vm2263, %v2158, -inf
      %v2269 = vsel %vm2263, %v2163, -inf
      %v2270 = vsel %vm2263, %v2168, -inf
      %v2271 = vsel %vm2263, %v2173, -inf
      %v2272 = vsel %vm2263, %v2178, -inf
      %v2273 = vsel %vm2263, %v2183, -inf
      %v2274 = vsel %vm2263, %v2188, -inf
      %v2275 = vsel %vm2263, %v2193, -inf
      %v2276 = vsel %vm2263, %v2198, -inf
      %v2277 = vsel %vm2263, %v2203, -inf
      %v2278 = vsel %vm2263, %v2208, -inf
      %v2279 = vsel %vm2263, %v2213, -inf
      %v2280 = vmax.f32 %v2103, %v2137
      %v2281 = vmax.f32 %v2009, %v2139
      %v2282 = vmax.f32 %v2008, %v2264
      %v2283 = vmax.f32 %v2104, %v2142
      %v2284 = vmax.f32 %v2012, %v2144
      %v2285 = vmax.f32 %v2011, %v2265
      %v2286 = vmax.f32 %v2105, %v2147
      %v2287 = vmax.f32 %v2015, %v2149
      %v2288 = vmax.f32 %v2014, %v2266
      %v2289 = vmax.f32 %v2106, %v2152
      %v2290 = vmax.f32 %v2018, %v2154
      %v2291 = vmax.f32 %v2017, %v2267
      %v2292 = vmax.f32 %v2107, %v2157
      %v2293 = vmax.f32 %v2021, %v2159
      %v2294 = vmax.f32 %v2020, %v2268
      %v2295 = vmax.f32 %v2108, %v2162
      %v2296 = vmax.f32 %v2024, %v2164
      %v2297 = vmax.f32 %v2023, %v2269
      %v2298 = vmax.f32 %v2109, %v2167
      %v2299 = vmax.f32 %v2027, %v2169
      %v2300 = vmax.f32 %v2026, %v2270
      %v2301 = vmax.f32 %v2110, %v2172
      %v2302 = vmax.f32 %v2030, %v2174
      %v2303 = vmax.f32 %v2029, %v2271
      %v2304 = vmax.f32 %v2111, %v2177
      %v2305 = vmax.f32 %v2033, %v2179
      %v2306 = vmax.f32 %v2032, %v2272
      %v2307 = vmax.f32 %v2112, %v2182
      %v2308 = vmax.f32 %v2036, %v2184
      %v2309 = vmax.f32 %v2035, %v2273
      %v2310 = vmax.f32 %v2113, %v2187
      %v2311 = vmax.f32 %v2039, %v2189
      %v2312 = vmax.f32 %v2038, %v2274
      %v2313 = vmax.f32 %v2114, %v2192
      %v2314 = vmax.f32 %v2042, %v2194
      %v2315 = vmax.f32 %v2041, %v2275
      %v2316 = vmax.f32 %v2115, %v2197
      %v2317 = vmax.f32 %v2045, %v2199
      %v2318 = vmax.f32 %v2044, %v2276
      %v2319 = vmax.f32 %v2116, %v2202
      %v2320 = vmax.f32 %v2048, %v2204
      %v2321 = vmax.f32 %v2047, %v2277
      %v2322 = vmax.f32 %v2117, %v2207
      %v2323 = vmax.f32 %v2051, %v2209
      %v2324 = vmax.f32 %v2050, %v2278
      %v2325 = vmax.f32 %v2118, %v2212
      %v2326 = vmax.f32 %v2054, %v2214
      %v2327 = vmax.f32 %v2053, %v2279
      %v2376 = vrot.slane %v2280, 2
      %v2377 = vrot.slane %v2281, 2
      %v2378 = vsel %vm780, %v2376, %v2377
      %v2379 = vrot.slane %v2282, 2
      %v2380 = vsel %vm780, %v2377, %v2379
      %v2381 = vrot.slane %v2283, 2
      %v2382 = vrot.slane %v2284, 2
      %v2383 = vsel %vm780, %v2381, %v2382
      %v2384 = vrot.slane %v2285, 2
      %v2385 = vsel %vm780, %v2382, %v2384
      %v2386 = vrot.slane %v2286, 2
      %v2387 = vrot.slane %v2287, 2
      %v2388 = vsel %vm780, %v2386, %v2387
      %v2389 = vrot.slane %v2288, 2
      %v2390 = vsel %vm780, %v2387, %v2389
      %v2391 = vrot.slane %v2289, 2
      %v2392 = vrot.slane %v2290, 2
      %v2393 = vsel %vm780, %v2391, %v2392
      %v2394 = vrot.slane %v2291, 2
      %v2395 = vsel %vm780, %v2392, %v2394
      %v2396 = vrot.slane %v2292, 2
      %v2397 = vrot.slane %v2293, 2
      %v2398 = vsel %vm780, %v2396, %v2397
      %v2399 = vrot.slane %v2294, 2
      %v2400 = vsel %vm780, %v2397, %v2399
      %v2401 = vrot.slane %v2295, 2
      %v2402 = vrot.slane %v2296, 2
      %v2403 = vsel %vm780, %v2401, %v2402
      %v2404 = vrot.slane %v2297, 2
      %v2405 = vsel %vm780, %v2402, %v2404
      %v2406 = vrot.slane %v2298, 2
      %v2407 = vrot.slane %v2299, 2
      %v2408 = vsel %vm780, %v2406, %v2407
      %v2409 = vrot.slane %v2300, 2
      %v2410 = vsel %vm780, %v2407, %v2409
      %v2411 = vrot.slane %v2301, 2
      %v2412 = vrot.slane %v2302, 2
      %v2413 = vsel %vm780, %v2411, %v2412
      %v2414 = vrot.slane %v2303, 2
      %v2415 = vsel %vm780, %v2412, %v2414
      %v2416 = vrot.slane %v2304, 2
      %v2417 = vrot.slane %v2305, 2
      %v2418 = vsel %vm780, %v2416, %v2417
      %v2419 = vrot.slane %v2306, 2
      %v2420 = vsel %vm780, %v2417, %v2419
      %v2421 = vrot.slane %v2307, 2
      %v2422 = vrot.slane %v2308, 2
      %v2423 = vsel %vm780, %v2421, %v2422
      %v2424 = vrot.slane %v2309, 2
      %v2425 = vsel %vm780, %v2422, %v2424
      %v2426 = vrot.slane %v2310, 2
      %v2427 = vrot.slane %v2311, 2
      %v2428 = vsel %vm780, %v2426, %v2427
      %v2429 = vrot.slane %v2312, 2
      %v2430 = vsel %vm780, %v2427, %v2429
      %v2431 = vrot.slane %v2313, 2
      %v2432 = vrot.slane %v2314, 2
      %v2433 = vsel %vm780, %v2431, %v2432
      %v2434 = vrot.slane %v2315, 2
      %v2435 = vsel %vm780, %v2432, %v2434
      %v2436 = vrot.slane %v2316, 2
      %v2437 = vrot.slane %v2317, 2
      %v2438 = vsel %vm780, %v2436, %v2437
      %v2439 = vrot.slane %v2318, 2
      %v2440 = vsel %vm780, %v2437, %v2439
      %v2441 = vrot.slane %v2319, 2
      %v2442 = vrot.slane %v2320, 2
      %v2443 = vsel %vm780, %v2441, %v2442
      %v2444 = vrot.slane %v2321, 2
      %v2445 = vsel %vm780, %v2442, %v2444
      %v2446 = vrot.slane %v2322, 2
      %v2447 = vrot.slane %v2323, 2
      %v2448 = vsel %vm780, %v2446, %v2447
      %v2449 = vrot.slane %v2324, 2
      %v2450 = vsel %vm780, %v2447, %v2449
      %v2451 = vrot.slane %v2325, 2
      %v2452 = vrot.slane %v2326, 2
      %v2453 = vsel %vm780, %v2451, %v2452
      %v2454 = vrot.slane %v2327, 2
      %v2455 = vsel %vm780, %v2452, %v2454
      %v2504 = vsel %vm925, %v2379, -inf
      %v2505 = vsel %vm925, %v2384, -inf
      %v2506 = vsel %vm925, %v2389, -inf
      %v2507 = vsel %vm925, %v2394, -inf
      %v2508 = vsel %vm925, %v2399, -inf
      %v2509 = vsel %vm925, %v2404, -inf
      %v2510 = vsel %vm925, %v2409, -inf
      %v2511 = vsel %vm925, %v2414, -inf
      %v2512 = vsel %vm925, %v2419, -inf
      %v2513 = vsel %vm925, %v2424, -inf
      %v2514 = vsel %vm925, %v2429, -inf
      %v2515 = vsel %vm925, %v2434, -inf
      %v2516 = vsel %vm925, %v2439, -inf
      %v2517 = vsel %vm925, %v2444, -inf
      %v2518 = vsel %vm925, %v2449, -inf
      %v2519 = vsel %vm925, %v2454, -inf
      %v2520 = vmax.f32 %v2280, %v2378
      %v2521 = vmax.f32 %v2281, %v2380
      %v2522 = vmax.f32 %v2282, %v2504
      %v2523 = vmax.f32 %v2283, %v2383
      %v2524 = vmax.f32 %v2284, %v2385
      %v2525 = vmax.f32 %v2285, %v2505
      %v2526 = vmax.f32 %v2286, %v2388
      %v2527 = vmax.f32 %v2287, %v2390
      %v2528 = vmax.f32 %v2288, %v2506
      %v2529 = vmax.f32 %v2289, %v2393
      %v2530 = vmax.f32 %v2290, %v2395
      %v2531 = vmax.f32 %v2291, %v2507
      %v2532 = vmax.f32 %v2292, %v2398
      %v2533 = vmax.f32 %v2293, %v2400
      %v2534 = vmax.f32 %v2294, %v2508
      %v2535 = vmax.f32 %v2295, %v2403
      %v2536 = vmax.f32 %v2296, %v2405
      %v2537 = vmax.f32 %v2297, %v2509
      %v2538 = vmax.f32 %v2298, %v2408
      %v2539 = vmax.f32 %v2299, %v2410
      %v2540 = vmax.f32 %v2300, %v2510
      %v2541 = vmax.f32 %v2301, %v2413
      %v2542 = vmax.f32 %v2302, %v2415
      %v2543 = vmax.f32 %v2303, %v2511
      %v2544 = vmax.f32 %v2304, %v2418
      %v2545 = vmax.f32 %v2305, %v2420
      %v2546 = vmax.f32 %v2306, %v2512
      %v2547 = vmax.f32 %v2307, %v2423
      %v2548 = vmax.f32 %v2308, %v2425
      %v2549 = vmax.f32 %v2309, %v2513
      %v2550 = vmax.f32 %v2310, %v2428
      %v2551 = vmax.f32 %v2311, %v2430
      %v2552 = vmax.f32 %v2312, %v2514
      %v2553 = vmax.f32 %v2313, %v2433
      %v2554 = vmax.f32 %v2314, %v2435
      %v2555 = vmax.f32 %v2315, %v2515
      %v2556 = vmax.f32 %v2316, %v2438
      %v2557 = vmax.f32 %v2317, %v2440
      %v2558 = vmax.f32 %v2318, %v2516
      %v2559 = vmax.f32 %v2319, %v2443
      %v2560 = vmax.f32 %v2320, %v2445
      %v2561 = vmax.f32 %v2321, %v2517
      %v2562 = vmax.f32 %v2322, %v2448
      %v2563 = vmax.f32 %v2323, %v2450
      %v2564 = vmax.f32 %v2324, %v2518
      %v2565 = vmax.f32 %v2325, %v2453
      %v2566 = vmax.f32 %v2326, %v2455
      %v2567 = vmax.f32 %v2327, %v2519
      %v2616 = vrot.slane %v2520, 4
      %v2617 = vrot.slane %v2521, 4
      %v2618 = vsel %vm925, %v2616, %v2617
      %v2619 = vrot.slane %v2522, 4
      %v2620 = vsel %vm925, %v2617, %v2619
      %v2621 = vrot.slane %v2523, 4
      %v2622 = vrot.slane %v2524, 4
      %v2623 = vsel %vm925, %v2621, %v2622
      %v2624 = vrot.slane %v2525, 4
      %v2625 = vsel %vm925, %v2622, %v2624
      %v2626 = vrot.slane %v2526, 4
      %v2627 = vrot.slane %v2527, 4
      %v2628 = vsel %vm925, %v2626, %v2627
      %v2629 = vrot.slane %v2528, 4
      %v2630 = vsel %vm925, %v2627, %v2629
      %v2631 = vrot.slane %v2529, 4
      %v2632 = vrot.slane %v2530, 4
      %v2633 = vsel %vm925, %v2631, %v2632
      %v2634 = vrot.slane %v2531, 4
      %v2635 = vsel %vm925, %v2632, %v2634
      %v2636 = vrot.slane %v2532, 4
      %v2637 = vrot.slane %v2533, 4
      %v2638 = vsel %vm925, %v2636, %v2637
      %v2639 = vrot.slane %v2534, 4
      %v2640 = vsel %vm925, %v2637, %v2639
      %v2641 = vrot.slane %v2535, 4
      %v2642 = vrot.slane %v2536, 4
      %v2643 = vsel %vm925, %v2641, %v2642
      %v2644 = vrot.slane %v2537, 4
      %v2645 = vsel %vm925, %v2642, %v2644
      %v2646 = vrot.slane %v2538, 4
      %v2647 = vrot.slane %v2539, 4
      %v2648 = vsel %vm925, %v2646, %v2647
      %v2649 = vrot.slane %v2540, 4
      %v2650 = vsel %vm925, %v2647, %v2649
      %v2651 = vrot.slane %v2541, 4
      %v2652 = vrot.slane %v2542, 4
      %v2653 = vsel %vm925, %v2651, %v2652
      %v2654 = vrot.slane %v2543, 4
      %v2655 = vsel %vm925, %v2652, %v2654
      %v2656 = vrot.slane %v2544, 4
      %v2657 = vrot.slane %v2545, 4
      %v2658 = vsel %vm925, %v2656, %v2657
      %v2659 = vrot.slane %v2546, 4
      %v2660 = vsel %vm925, %v2657, %v2659
      %v2661 = vrot.slane %v2547, 4
      %v2662 = vrot.slane %v2548, 4
      %v2663 = vsel %vm925, %v2661, %v2662
      %v2664 = vrot.slane %v2549, 4
      %v2665 = vsel %vm925, %v2662, %v2664
      %v2666 = vrot.slane %v2550, 4
      %v2667 = vrot.slane %v2551, 4
      %v2668 = vsel %vm925, %v2666, %v2667
      %v2669 = vrot.slane %v2552, 4
      %v2670 = vsel %vm925, %v2667, %v2669
      %v2671 = vrot.slane %v2553, 4
      %v2672 = vrot.slane %v2554, 4
      %v2673 = vsel %vm925, %v2671, %v2672
      %v2674 = vrot.slane %v2555, 4
      %v2675 = vsel %vm925, %v2672, %v2674
      %v2676 = vrot.slane %v2556, 4
      %v2677 = vrot.slane %v2557, 4
      %v2678 = vsel %vm925, %v2676, %v2677
      %v2679 = vrot.slane %v2558, 4
      %v2680 = vsel %vm925, %v2677, %v2679
      %v2681 = vrot.slane %v2559, 4
      %v2682 = vrot.slane %v2560, 4
      %v2683 = vsel %vm925, %v2681, %v2682
      %v2684 = vrot.slane %v2561, 4
      %v2685 = vsel %vm925, %v2682, %v2684
      %v2686 = vrot.slane %v2562, 4
      %v2687 = vrot.slane %v2563, 4
      %v2688 = vsel %vm925, %v2686, %v2687
      %v2689 = vrot.slane %v2564, 4
      %v2690 = vsel %vm925, %v2687, %v2689
      %v2691 = vrot.slane %v2565, 4
      %v2692 = vrot.slane %v2566, 4
      %v2693 = vsel %vm925, %v2691, %v2692
      %v2694 = vrot.slane %v2567, 4
      %v2695 = vsel %vm925, %v2692, %v2694
      %v2728 = vmax.f32 %v2520, %v2618
      %v2729 = vmax.f32 %v2521, %v2620
      %v2730 = vmax.f32 %v2523, %v2623
      %v2731 = vmax.f32 %v2524, %v2625
      %v2732 = vmax.f32 %v2526, %v2628
      %v2733 = vmax.f32 %v2527, %v2630
      %v2734 = vmax.f32 %v2529, %v2633
      %v2735 = vmax.f32 %v2530, %v2635
      %v2736 = vmax.f32 %v2532, %v2638
      %v2737 = vmax.f32 %v2533, %v2640
      %v2738 = vmax.f32 %v2535, %v2643
      %v2739 = vmax.f32 %v2536, %v2645
      %v2740 = vmax.f32 %v2538, %v2648
      %v2741 = vmax.f32 %v2539, %v2650
      %v2742 = vmax.f32 %v2541, %v2653
      %v2743 = vmax.f32 %v2542, %v2655
      %v2744 = vmax.f32 %v2544, %v2658
      %v2745 = vmax.f32 %v2545, %v2660
      %v2746 = vmax.f32 %v2547, %v2663
      %v2747 = vmax.f32 %v2548, %v2665
      %v2748 = vmax.f32 %v2550, %v2668
      %v2749 = vmax.f32 %v2551, %v2670
      %v2750 = vmax.f32 %v2553, %v2673
      %v2751 = vmax.f32 %v2554, %v2675
      %v2752 = vmax.f32 %v2556, %v2678
      %v2753 = vmax.f32 %v2557, %v2680
      %v2754 = vmax.f32 %v2559, %v2683
      %v2755 = vmax.f32 %v2560, %v2685
      %v2756 = vmax.f32 %v2562, %v2688
      %v2757 = vmax.f32 %v2563, %v2690
      %v2758 = vmax.f32 %v2565, %v2693
      %v2759 = vmax.f32 %v2566, %v2695
      %v2760 = vrot.slane %v2009, 4
      %v2761 = vrot.slane %v2008, 4
      %v2762 = vsel %vm925, %v2760, %v2761
      %v2763 = vrot.slane %v2012, 4
      %v2764 = vrot.slane %v2011, 4
      %v2765 = vsel %vm925, %v2763, %v2764
      %v2766 = vrot.slane %v2015, 4
      %v2767 = vrot.slane %v2014, 4
      %v2768 = vsel %vm925, %v2766, %v2767
      %v2769 = vrot.slane %v2018, 4
      %v2770 = vrot.slane %v2017, 4
      %v2771 = vsel %vm925, %v2769, %v2770
      %v2772 = vrot.slane %v2021, 4
      %v2773 = vrot.slane %v2020, 4
      %v2774 = vsel %vm925, %v2772, %v2773
      %v2775 = vrot.slane %v2024, 4
      %v2776 = vrot.slane %v2023, 4
      %v2777 = vsel %vm925, %v2775, %v2776
      %v2778 = vrot.slane %v2027, 4
      %v2779 = vrot.slane %v2026, 4
      %v2780 = vsel %vm925, %v2778, %v2779
      %v2781 = vrot.slane %v2030, 4
      %v2782 = vrot.slane %v2029, 4
      %v2783 = vsel %vm925, %v2781, %v2782
      %v2784 = vrot.slane %v2033, 4
      %v2785 = vrot.slane %v2032, 4
      %v2786 = vsel %vm925, %v2784, %v2785
      %v2787 = vrot.slane %v2036, 4
      %v2788 = vrot.slane %v2035, 4
      %v2789 = vsel %vm925, %v2787, %v2788
      %v2790 = vrot.slane %v2039, 4
      %v2791 = vrot.slane %v2038, 4
      %v2792 = vsel %vm925, %v2790, %v2791
      %v2793 = vrot.slane %v2042, 4
      %v2794 = vrot.slane %v2041, 4
      %v2795 = vsel %vm925, %v2793, %v2794
      %v2796 = vrot.slane %v2045, 4
      %v2797 = vrot.slane %v2044, 4
      %v2798 = vsel %vm925, %v2796, %v2797
      %v2799 = vrot.slane %v2048, 4
      %v2800 = vrot.slane %v2047, 4
      %v2801 = vsel %vm925, %v2799, %v2800
      %v2802 = vrot.slane %v2051, 4
      %v2803 = vrot.slane %v2050, 4
      %v2804 = vsel %vm925, %v2802, %v2803
      %v2805 = vrot.slane %v2054, 4
      %v2806 = vrot.slane %v2053, 4
      %v2807 = vsel %vm925, %v2805, %v2806
      %v2840 = vsel %vm409, %v2761, -inf
      %v2841 = vsel %vm409, %v2764, -inf
      %v2842 = vsel %vm409, %v2767, -inf
      %v2843 = vsel %vm409, %v2770, -inf
      %v2844 = vsel %vm409, %v2773, -inf
      %v2845 = vsel %vm409, %v2776, -inf
      %v2846 = vsel %vm409, %v2779, -inf
      %v2847 = vsel %vm409, %v2782, -inf
      %v2848 = vsel %vm409, %v2785, -inf
      %v2849 = vsel %vm409, %v2788, -inf
      %v2850 = vsel %vm409, %v2791, -inf
      %v2851 = vsel %vm409, %v2794, -inf
      %v2852 = vsel %vm409, %v2797, -inf
      %v2853 = vsel %vm409, %v2800, -inf
      %v2854 = vsel %vm409, %v2803, -inf
      %v2855 = vsel %vm409, %v2806, -inf
      %v2856 = vmax.f32 %v2521, %v2762
      %v2857 = vmax.f32 %v2522, %v2840
      %v2858 = vmax.f32 %v2524, %v2765
      %v2859 = vmax.f32 %v2525, %v2841
      %v2860 = vmax.f32 %v2527, %v2768
      %v2861 = vmax.f32 %v2528, %v2842
      %v2862 = vmax.f32 %v2530, %v2771
      %v2863 = vmax.f32 %v2531, %v2843
      %v2864 = vmax.f32 %v2533, %v2774
      %v2865 = vmax.f32 %v2534, %v2844
      %v2866 = vmax.f32 %v2536, %v2777
      %v2867 = vmax.f32 %v2537, %v2845
      %v2868 = vmax.f32 %v2539, %v2780
      %v2869 = vmax.f32 %v2540, %v2846
      %v2870 = vmax.f32 %v2542, %v2783
      %v2871 = vmax.f32 %v2543, %v2847
      %v2872 = vmax.f32 %v2545, %v2786
      %v2873 = vmax.f32 %v2546, %v2848
      %v2874 = vmax.f32 %v2548, %v2789
      %v2875 = vmax.f32 %v2549, %v2849
      %v2876 = vmax.f32 %v2551, %v2792
      %v2877 = vmax.f32 %v2552, %v2850
      %v2878 = vmax.f32 %v2554, %v2795
      %v2879 = vmax.f32 %v2555, %v2851
      %v2880 = vmax.f32 %v2557, %v2798
      %v2881 = vmax.f32 %v2558, %v2852
      %v2882 = vmax.f32 %v2560, %v2801
      %v2883 = vmax.f32 %v2561, %v2853
      %v2884 = vmax.f32 %v2563, %v2804
      %v2885 = vmax.f32 %v2564, %v2854
      %v2886 = vmax.f32 %v2566, %v2807
      %v2887 = vmax.f32 %v2567, %v2855
      %v2888 = vsel %vm780, %v2857, -inf
      %v2889 = vsel %vm780, %v2859, -inf
      %v2890 = vsel %vm780, %v2861, -inf
      %v2891 = vsel %vm780, %v2863, -inf
      %v2892 = vsel %vm780, %v2865, -inf
      %v2893 = vsel %vm780, %v2867, -inf
      %v2894 = vsel %vm780, %v2869, -inf
      %v2895 = vsel %vm780, %v2871, -inf
      %v2896 = vsel %vm780, %v2873, -inf
      %v2897 = vsel %vm780, %v2875, -inf
      %v2898 = vsel %vm780, %v2877, -inf
      %v2899 = vsel %vm780, %v2879, -inf
      %v2900 = vsel %vm780, %v2881, -inf
      %v2901 = vsel %vm780, %v2883, -inf
      %v2902 = vsel %vm780, %v2885, -inf
      %v2903 = vsel %vm780, %v2887, -inf
      %v2904 = vmax.f32 %v2728, %v2856
      %v2905 = vmax.f32 %v2729, %v2888
      %v2906 = vmax.f32 %v2730, %v2858
      %v2907 = vmax.f32 %v2731, %v2889
      %v2908 = vmax.f32 %v2732, %v2860
      %v2909 = vmax.f32 %v2733, %v2890
      %v2910 = vmax.f32 %v2734, %v2862
      %v2911 = vmax.f32 %v2735, %v2891
      %v2912 = vmax.f32 %v2736, %v2864
      %v2913 = vmax.f32 %v2737, %v2892
      %v2914 = vmax.f32 %v2738, %v2866
      %v2915 = vmax.f32 %v2739, %v2893
      %v2916 = vmax.f32 %v2740, %v2868
      %v2917 = vmax.f32 %v2741, %v2894
      %v2918 = vmax.f32 %v2742, %v2870
      %v2919 = vmax.f32 %v2743, %v2895
      %v2920 = vmax.f32 %v2744, %v2872
      %v2921 = vmax.f32 %v2745, %v2896
      %v2922 = vmax.f32 %v2746, %v2874
      %v2923 = vmax.f32 %v2747, %v2897
      %v2924 = vmax.f32 %v2748, %v2876
      %v2925 = vmax.f32 %v2749, %v2898
      %v2926 = vmax.f32 %v2750, %v2878
      %v2927 = vmax.f32 %v2751, %v2899
      %v2928 = vmax.f32 %v2752, %v2880
      %v2929 = vmax.f32 %v2753, %v2900
      %v2930 = vmax.f32 %v2754, %v2882
      %v2931 = vmax.f32 %v2755, %v2901
      %v2932 = vmax.f32 %v2756, %v2884
      %v2933 = vmax.f32 %v2757, %v2902
      %v2934 = vmax.f32 %v2758, %v2886
      %v2935 = vmax.f32 %v2759, %v2903
      %s2936 = scalar_lea.vmem %s147, 768
      %2937 = vst.msk [vmem:[%s2936] sm:$0xff] %vm180, %v2904
      %2938 = vst.msk [vmem:[%s2936 + $0x8] sm:$0xff] %vm180, %v2905
      %2939 = vst.msk [vmem:[%s2936 + $0x10] sm:$0xff] %vm180, %v2906
      %2940 = vst.msk [vmem:[%s2936 + $0x18] sm:$0xff] %vm180, %v2907
      %2941 = vst.msk [vmem:[%s2936 + $0x20] sm:$0xff] %vm180, %v2908
      %2942 = vst.msk [vmem:[%s2936 + $0x28] sm:$0xff] %vm180, %v2909
      %2943 = vst.msk [vmem:[%s2936 + $0x30] sm:$0xff] %vm180, %v2910
      %2944 = vst.msk [vmem:[%s2936 + $0x38] sm:$0xff] %vm180, %v2911
      %2945 = vst.msk [vmem:[%s2936 + $0x40] sm:$0xff] %vm180, %v2912
      %2946 = vst.msk [vmem:[%s2936 + $0x48] sm:$0xff] %vm180, %v2913
      %2947 = vst.msk [vmem:[%s2936 + $0x50] sm:$0xff] %vm180, %v2914
      %2948 = vst.msk [vmem:[%s2936 + $0x58] sm:$0xff] %vm180, %v2915
      %2949 = vst.msk [vmem:[%s2936 + $0x60] sm:$0xff] %vm180, %v2916
      %2950 = vst.msk [vmem:[%s2936 + $0x68] sm:$0xff] %vm180, %v2917
      %2951 = vst.msk [vmem:[%s2936 + $0x70] sm:$0xff] %vm180, %v2918
      %2952 = vst.msk [vmem:[%s2936 + $0x78] sm:$0xff] %vm180, %v2919
      %2953 = vst.msk [vmem:[%s2936 + $0x80] sm:$0xff] %vm180, %v2920
      %2954 = vst.msk [vmem:[%s2936 + $0x88] sm:$0xff] %vm180, %v2921
      %2955 = vst.msk [vmem:[%s2936 + $0x90] sm:$0xff] %vm180, %v2922
      %2956 = vst.msk [vmem:[%s2936 + $0x98] sm:$0xff] %vm180, %v2923
      %2957 = vst.msk [vmem:[%s2936 + $0xa0] sm:$0xff] %vm180, %v2924
      %2958 = vst.msk [vmem:[%s2936 + $0xa8] sm:$0xff] %vm180, %v2925
      %2959 = vst.msk [vmem:[%s2936 + $0xb0] sm:$0xff] %vm180, %v2926
      %2960 = vst.msk [vmem:[%s2936 + $0xb8] sm:$0xff] %vm180, %v2927
      %2961 = vst.msk [vmem:[%s2936 + $0xc0] sm:$0xff] %vm180, %v2928
      %2962 = vst.msk [vmem:[%s2936 + $0xc8] sm:$0xff] %vm180, %v2929
      %2963 = vst.msk [vmem:[%s2936 + $0xd0] sm:$0xff] %vm180, %v2930
      %2964 = vst.msk [vmem:[%s2936 + $0xd8] sm:$0xff] %vm180, %v2931
      %2965 = vst.msk [vmem:[%s2936 + $0xe0] sm:$0xff] %vm180, %v2932
      %2966 = vst.msk [vmem:[%s2936 + $0xe8] sm:$0xff] %vm180, %v2933
      %2967 = vst.msk [vmem:[%s2936 + $0xf0] sm:$0xff] %vm180, %v2934
      %2968 = vst.msk [vmem:[%s2936 + $0xf8] sm:$0xff] %vm180, %v2935
      %p2969 = scmp.lt.s32.totalorder %s16, 1
      %s2970 = scalar_select %p2969, %s16, 1
      %p2971 = scmp.lt.s32.totalorder %s17, 0
      %s2972 = scalar_select %p2971, %s17, 0
      %s2973 = smul.addr %s2970, 128
      %s2974 = sadd.s32 %s2972, %s2973
      %s2975 = smul.addr %s2974, 8
      %s2976 = scalar_lea.vmem %s1, %s2975
      // Predicated region
      $region25: #{tpu_custom_call.1} parent=23 // pred_check
        %p2977 = pneg %p72
      $region26: #{tpu_custom_call.1} parent=23 // pred_check_branch
        %2979 = sbr.rel (%p2977) target = $region28
      $region27: #{tpu_custom_call.1} parent=23 // pred_region
        _
      $region28: #{tpu_custom_call.1} parent=23 // pred_fallthru
        _
    $region24: #{tpu_custom_call.1} parent=5 // pred_fallthru
      _
    %p2980 = scmp.le.s32.totalorder 2, %s7
    // Predicated region
    $region29: #{tpu_custom_call.1} parent=5 // pred_check
      %p2981 = pneg %p2980
    $region30: #{tpu_custom_call.1} parent=5 // pred_check_branch
      %2983 = sbr.rel (%p2981) target = $region32
    $region31: #{tpu_custom_call.1} parent=5 // pred_region
      %s2984 = ssub.s32 %s7, 2
      // Predicated region
      $region33: #{tpu_custom_call.1} parent=31 // pred_check
        %p2985 = pneg %p78
      $region34: #{tpu_custom_call.1} parent=31 // pred_check_branch
        %2987 = sbr.rel (%p2985) target = $region36
      $region35: #{tpu_custom_call.1} parent=31 // pred_region
        %p2988 = scmp.lt.s32.totalorder %s18, 1
        %s2989 = scalar_select %p2988, %s18, 1
        %p2990 = scmp.lt.s32.totalorder %s19, 0
        %s2991 = scalar_select %p2990, %s19, 0
        %s2992 = smul.addr %s2989, 128
        %s2993 = sadd.s32 %s2991, %s2992
        %s2994 = smul.addr %s2993, 8
        %s2995 = scalar_lea.vmem %s1, %s2994
      $region36: #{tpu_custom_call.1} parent=31 // pred_fallthru
        _
    $region32: #{tpu_custom_call.1} parent=5 // pred_fallthru
      _
  $region6: #{tpu_custom_call.1} parent=0 // loop_footer
    %s11 = sadd.s32 1, %s7
  $region7: #{tpu_custom_call.1} parent=0 // loop_footer_branch
    %6 = sbr.rel target = $region3
  $region8: #{tpu_custom_call.1} parent=0 // loop_exit
    _

</llo_original>
